<compile_context>
chip_gen: v6e
topology: v6e:2x2x1
jax: 0.10.0
libtpu: 0.0.40
codegen_flags: <defaults>
</compile_context>

<pallas_src>
import functools

import numpy as np
import jax
import jax.numpy as jnp
from jax.experimental import pallas as pl
from jax.experimental.pallas import tpu as pltpu


# ---------------------------------------------------------------------------
# Pallas kernel: batched (graph construction + decay mask + input-BN + MPNN)
# ---------------------------------------------------------------------------
def _graph_mpnn_kernel(x_ref, c_ref, wm_ref, vec_ref, wcat_ref, s_ref, *, k, slope):
    gb, N, D = x_ref.shape                      # G_B graphs per grid step
    Dout = s_ref.shape[-1]

    X = x_ref[...].astype(jnp.float32)          # (G_B, N, D) raw windowed features
    mask = c_ref[0].astype(jnp.float32)         # (N, N) time-decay pre_relation
    eye = c_ref[1].astype(jnp.float32)          # (N, N) identity
    neg_diag = c_ref[2].astype(jnp.float32)     # (N, N) 1e8 * identity (pre-folded)
    Wm = wm_ref[...].astype(jnp.float32)        # (D, D) mapping weight (pre-transposed)
    bm = vec_ref[0:1, :].astype(jnp.float32)    # (1, D) mapping bias
    in_scale = vec_ref[1:2, :].astype(jnp.float32)  # (1, D) folded input-BN scale
    in_shift = vec_ref[2:3, :].astype(jnp.float32)  # (1, D) folded input-BN shift
    Wcat = wcat_ref[...].astype(jnp.float32)    # (k*D, Dout) fused theta weights

    # --- Dot_Graph_Construction_weights ------------------------------------
    # Mapping Linear fused across all graphs of the block: one (G_B*N, D) GEMM.
    Xf = X.reshape(gb * N, D)                                               # leading-dim merge (free)
    nf = jnp.dot(Xf, Wm, preferred_element_type=jnp.float32) + bm           # (G_B*N, D)
    nf3 = nf.reshape(gb, N, D)
    # Per-graph Gram matrices (block-diagonal -> batched einsum, feature contraction).
    G = jnp.einsum("bid,bjd->bij", nf3, nf3,
                   preferred_element_type=jnp.float32)                      # (G_B, N, N)
    Gm = G - neg_diag                                                       # mask self-edges
    Gm = jnp.where(Gm > 0, Gm, slope * Gm)                                  # leaky_relu
    Gm = Gm - jnp.max(Gm, axis=-1, keepdims=True)
    E = jnp.exp(Gm)
    inv = pl.reciprocal(jnp.sum(E, axis=-1, keepdims=True), approx=False)   # EUP-side divide
    A = E * inv                                                             # softmax
    # (softmax + I) * mask == softmax * mask + I  (mask diagonal == decay^0 == 1)
    A = A * mask + eye                                                      # (G_B, N, N)

    # --- input BatchNorm1d applied as precomputed scale/shift --------------
    Xb = (Xf * in_scale + in_shift).reshape(gb, N, D)                       # (G_B, N, D)

    # --- MPNN_mk: AX recurrence + single fused projection -------------------
    ax = jnp.einsum("bij,bjd->bid", A, Xb,
                    preferred_element_type=jnp.float32)                     # A @ X
    terms = [ax]
    for _ in range(1, k):
        ax = jnp.einsum("bij,bjd->bid", A, ax,
                        preferred_element_type=jnp.float32)                 # A^j X via recurrence
        terms.append(ax)
    feat = terms[0] if k == 1 else jnp.concatenate(terms, axis=-1)          # (G_B, N, k*D)
    featf = feat.reshape(gb * N, k * D)
    # theta biases omitted here: a per-feature constant is exactly cancelled by
    # the training-mode BatchNorm (batch statistics) applied right after this kernel.
    S = jnp.dot(featf, Wcat, preferred_element_type=jnp.float32)            # (G_B*N, Dout)
    s_ref[...] = S.reshape(gb, N, Dout).astype(s_ref.dtype)


def _default_grid_steps(bw):
    """2 grid steps on dual-TensorCore chips (megacore sharding), 1 otherwise."""
    steps = 1
    try:
        kind = jax.devices()[0].device_kind.lower()
        if any(tag in kind for tag in ("v7", "v4", "v5p")):
            steps = 2
    except Exception:
        steps = 1
    if bw % steps != 0 or bw < steps:
        steps = 1
    return steps


def _graph_mpnn_pallas(X0, consts, Wm_T, vecs, Wcat, *, k, slope, num_steps):
    BW, N, D = X0.shape
    Dout = Wcat.shape[-1]
    gb = BW // num_steps
    kernel = functools.partial(_graph_mpnn_kernel, k=k, slope=slope)
    return pl.pallas_call(
        kernel,
        out_shape=jax.ShapeDtypeStruct((BW, N, Dout), X0.dtype),
        grid=(num_steps,),
        in_specs=[
            pl.BlockSpec((gb, N, D), lambda g: (g, 0, 0)),       # G_B graphs of node features
            pl.BlockSpec((3, N, N), lambda g: (0, 0, 0)),        # [mask, eye, 1e8*eye]
            pl.BlockSpec((D, D), lambda g: (0, 0)),              # mapping weight (transposed)
            pl.BlockSpec((3, D), lambda g: (0, 0)),              # [bmap, bn_scale, bn_shift]
            pl.BlockSpec((k * D, Dout), lambda g: (0, 0)),       # fused theta weights
        ],
        out_specs=pl.BlockSpec((gb, N, Dout), lambda g: (g, 0, 0)),
        compiler_params=pltpu.CompilerParams(
            # Only matters on dual-TC chips; a single step on v5e/v6e is unaffected.
            dimension_semantics=("parallel",)),
        # NOTE: total VMEM footprint is ~100 KiB here; set vmem_limit_bytes only
        # if G_B / N are scaled up to production sizes (v5e default is 16 MiB).
    )(X0, consts, Wm_T, vecs, Wcat)


# ---------------------------------------------------------------------------
# Wrapper-side helpers (pure indexing / constant construction)
# ---------------------------------------------------------------------------
def conv_graph_st(x, time_window_size, stride):
    """Sliding time-window unfold: (bs,T,ns,D) -> (bs,nw,tws,ns,D).
    Element [b,w,t,s,f] = x[b, w*stride+t, s, f]  (== Conv_GraphST + transpose(2,3))."""
    T = x.shape[1]
    nw = (T - time_window_size) // stride + 1
    idx = jnp.arange(nw)[:, None] * stride + jnp.arange(time_window_size)[None, :]
    return x[:, idx]                                   # (bs, nw, tws, ns, D)


def mask_matrix(num_node, time_length, decay):
    """Mask_Matrix: block (i,j) (time blocks of size num_node) scaled by decay**|i-j|."""
    t = np.repeat(np.arange(time_length), num_node)
    return (decay ** np.abs(t[:, None] - t[None, :])).astype(np.float32)


def graph_convpool_mpnn_block_v6(x, params, *, time_window_size, stride,
                                 pool_choice="mean", k=1, eps=1e-5, slope=0.01,
                                 num_grid_steps=None):
    bs, T, ns, D = x.shape
    w = conv_graph_st(x, time_window_size, stride)           # (bs, nw, tws, ns, D)
    nw = w.shape[1]
    N = time_window_size * ns
    X0 = w.reshape(bs * nw, N, D)
    BW = bs * nw

    # input BatchNorm1d (training-mode batch statistics) folded into scale/shift
    mu = jnp.mean(X0, axis=(0, 1))
    var = jnp.mean((X0 - mu) ** 2, axis=(0, 1))
    s_in = params["bn_in_gamma"] * jax.lax.rsqrt(var + eps)
    t_in = params["bn_in_beta"] - mu * s_in

    # Packed small operands: fewer BlockSpecs -> fewer DMA descriptors per step.
    vecs = jnp.stack([params["bmap"], s_in, t_in], axis=0)                  # (3, D)
    eye = jnp.eye(N, dtype=jnp.float32)
    consts = jnp.stack([params["pre_relation"], eye, 1e8 * eye], axis=0)    # (3, N, N)

    if num_grid_steps is None:
        num_grid_steps = _default_grid_steps(BW)
    if BW % num_grid_steps != 0:
        num_grid_steps = 1

    S = _graph_mpnn_pallas(
        X0, consts, params["Wmap_T"], vecs, params["Wcat"],
        k=k, slope=slope, num_steps=num_grid_steps)          # (bs*nw, N, Dout)

    # MPNN-output BatchNorm1d (cross-graph batch stats) + leaky_relu + window pooling.
    mu1 = jnp.mean(S, axis=(0, 1))
    var1 = jnp.mean((S - mu1) ** 2, axis=(0, 1))
    s1 = params["bn1_gamma"] * jax.lax.rsqrt(var1 + eps)
    t1 = params["bn1_beta"] - mu1 * s1
    y = S * s1 + t1
    y = jnp.where(y > 0, y, slope * y)
    y = y.reshape(bs, nw, time_window_size, ns, -1)
    if pool_choice == "mean":
        return jnp.mean(y, axis=2)
    return jnp.max(y, axis=2)


# ---------------------------------------------------------------------------
# Pure-JAX reference mirroring the PyTorch forward (training mode, with biases)
# ---------------------------------------------------------------------------
def reference_forward(x, params, *, time_window_size, stride,
                      pool_choice="mean", k=1, eps=1e-5, slope=0.01):
    HI = jax.lax.Precision.HIGHEST
    bs, T, ns, D = x.shape
    w = conv_graph_st(x, time_window_size, stride)
    nw = w.shape[1]
    N = time_window_size * ns
    X0 = w.reshape(bs * nw, N, D)

    # Dot_Graph_Construction_weights
    nf = jnp.einsum("bnd,ed->bne", X0, params["Wmap"], precision=HI) + params["bmap"]
    G = jnp.einsum("bid,bjd->bij", nf, nf, precision=HI)
    eye = jnp.eye(N, dtype=x.dtype)
    Gm = G - eye * 1e8
    Gm = jnp.where(Gm > 0, Gm, slope * Gm)
    A = jax.nn.softmax(Gm, axis=-1) + eye
    A = A * params["pre_relation"]

    # input BatchNorm1d (training mode, biased variance)
    mu = jnp.mean(X0, axis=(0, 1))
    var = jnp.mean((X0 - mu) ** 2, axis=(0, 1))
    Xb = (X0 - mu) * jax.lax.rsqrt(var + eps) * params["bn_in_gamma"] + params["bn_in_beta"]

    # MPNN_mk_v2 (A-power chain + per-hop Linear incl. bias, exactly as PyTorch)
    acc = None
    A_ = None
    for kk in range(k):
        A_ = A if kk == 0 else jnp.einsum("bij,bjk->bik", A_, A, precision=HI)
        ax = jnp.einsum("bij,bjd->bid", A_, Xb, precision=HI)
        out_k = jnp.einsum("bnd,od->bno", ax, params["Wt"][kk], precision=HI) + params["bt"][kk]
        acc = out_k if acc is None else acc + out_k

    mu1 = jnp.mean(acc, axis=(0, 1))
    var1 = jnp.mean((acc - mu1) ** 2, axis=(0, 1))
    y = (acc - mu1) * jax.lax.rsqrt(var1 + eps) * params["bn1_gamma"] + params["bn1_beta"]
    y = jnp.where(y > 0, y, slope * y)
    y = y.reshape(bs, nw, time_window_size, ns, -1)
    return jnp.mean(y, axis=2) if pool_choice == "mean" else jnp.max(y, axis=2)


if __name__ == "__main__":
    # Small shapes consistent with the module:
    #   bs=2, time_length=8, num_sensors=8, input_dim=8,
    #   time_window_size=4, stride=2, output_dim=32, decay=0.7, k=1, mean pooling.
    bs, time_length, num_sensors, input_dim = 2, 8, 8, 8
    time_window_size, stride = 4, 2
    output_dim, decay, k = 32, 0.7, 1
    pool_choice = "mean"

    key = jax.random.PRNGKey(0)
    kx, k1, k2, k3, k4, k5, k6, k7, k8 = jax.random.split(key, 9)

    x = jax.random.normal(kx, (bs, time_length, num_sensors, input_dim), dtype=jnp.float32)

    # Parameters (PyTorch layouts; Linear weight is (out, in))
    Wmap = 0.3 * jax.random.normal(k1, (input_dim, input_dim), dtype=jnp.float32)
    bmap = 0.05 * jax.random.normal(k2, (input_dim,), dtype=jnp.float32)
    Wt = 0.2 * jax.random.normal(k3, (k, output_dim, input_dim), dtype=jnp.float32)
    bt = 0.05 * jax.random.normal(k4, (k, output_dim), dtype=jnp.float32)
    bn_in_gamma = 1.0 + 0.1 * jax.random.normal(k5, (input_dim,), dtype=jnp.float32)
    bn_in_beta = 0.05 * jax.random.normal(k6, (input_dim,), dtype=jnp.float32)
    bn1_gamma = 1.0 + 0.1 * jax.random.normal(k7, (output_dim,), dtype=jnp.float32)
    bn1_beta = 0.05 * jax.random.normal(k8, (output_dim,), dtype=jnp.float32)

    params = {
        "Wmap": Wmap,
        "Wmap_T": Wmap.T,                    # pre-transposed for X @ W^T inside the kernel
        "bmap": bmap,
        "Wt": Wt,
        "bt": bt,                            # used only by the reference (cancels under BN)
        # theta weights pre-transposed per hop and concatenated: (k*D, Dout)
        "Wcat": jnp.concatenate([Wt[kk].T for kk in range(k)], axis=0),
        "bn_in_gamma": bn_in_gamma,
        "bn_in_beta": bn_in_beta,
        "bn1_gamma": bn1_gamma,
        "bn1_beta": bn1_beta,
        "pre_relation": jnp.asarray(mask_matrix(num_sensors, time_window_size, decay)),
    }

    out = graph_convpool_mpnn_block_v6(
        x, params, time_window_size=time_window_size, stride=stride,
        pool_choice=pool_choice, k=k)
    out = jax.block_until_ready(out)

    ref = reference_forward(
        x, params, time_window_size=time_window_size, stride=stride,
        pool_choice=pool_choice, k=k)
    ref = jax.block_until_ready(ref)

    num_windows = (time_length - time_window_size) // stride + 1
    assert out.shape == (bs, num_windows, num_sensors, output_dim), out.shape
    max_err = float(jnp.max(jnp.abs(out - ref)))
    assert jnp.allclose(out, ref, atol=1e-4, rtol=1e-4), f"mismatch vs reference, max_err={max_err}"

    print("KERNEL_OK")
</pallas_src>

<mosaic_0001>
module attributes {stable_mosaic.version = 11 : i64} {
  func.func @_graph_mpnn_kernel(%arg0: i32, %arg1: memref<6x32x8xf32, #tpu.memory_space<vmem>>, %arg2: memref<3x32x32xf32, #tpu.memory_space<vmem>>, %arg3: memref<8x8xf32, #tpu.memory_space<vmem>>, %arg4: memref<3x8xf32, #tpu.memory_space<vmem>>, %arg5: memref<8x32xf32, #tpu.memory_space<vmem>>, %arg6: memref<6x32x32xf32, #tpu.memory_space<vmem>>) attributes {dimension_semantics = [#tpu.dimension_semantics<parallel>], iteration_bounds = array<i64: 1>, scalar_prefetch = 0 : i64, scratch_operands = 0 : i64, tpu.core_type = #tpu.core_type<tc>, window_params = [{transform_indices = @transform_0, window_bounds = array<i64: 6, 32, 8>}, {pipeline_mode = #tpu.pipeline_mode<synchronous>, transform_indices = @transform_1, window_bounds = array<i64: 3, 32, 32>}, {pipeline_mode = #tpu.pipeline_mode<synchronous>, transform_indices = @transform_2, window_bounds = array<i64: 8, 8>}, {pipeline_mode = #tpu.pipeline_mode<synchronous>, transform_indices = @transform_3, window_bounds = array<i64: 3, 8>}, {pipeline_mode = #tpu.pipeline_mode<synchronous>, transform_indices = @transform_4, window_bounds = array<i64: 8, 32>}, {transform_indices = @transform_5, window_bounds = array<i64: 6, 32, 32>}]} {
    %c0 = arith.constant 0 : index
    %c0_0 = arith.constant 0 : index
    %c0_1 = arith.constant 0 : index
    %0 = vector.load %arg1[%c0, %c0_0, %c0_1] : memref<6x32x8xf32, #tpu.memory_space<vmem>>, vector<6x32x8xf32>
    %c0_2 = arith.constant 0 : index
    %c0_3 = arith.constant 0 : index
    %c0_4 = arith.constant 0 : index
    %1 = vector.load %arg2[%c0_2, %c0_3, %c0_4] : memref<3x32x32xf32, #tpu.memory_space<vmem>>, vector<1x32x32xf32>
    %2 = vector.shape_cast %1 : vector<1x32x32xf32> to vector<32x32xf32>
    %c1 = arith.constant 1 : index
    %c0_5 = arith.constant 0 : index
    %c0_6 = arith.constant 0 : index
    %3 = vector.load %arg2[%c1, %c0_5, %c0_6] : memref<3x32x32xf32, #tpu.memory_space<vmem>>, vector<1x32x32xf32>
    %4 = vector.shape_cast %3 : vector<1x32x32xf32> to vector<32x32xf32>
    %c2 = arith.constant 2 : index
    %c0_7 = arith.constant 0 : index
    %c0_8 = arith.constant 0 : index
    %5 = vector.load %arg2[%c2, %c0_7, %c0_8] : memref<3x32x32xf32, #tpu.memory_space<vmem>>, vector<1x32x32xf32>
    %6 = vector.shape_cast %5 : vector<1x32x32xf32> to vector<32x32xf32>
    %c0_9 = arith.constant 0 : index
    %c0_10 = arith.constant 0 : index
    %7 = vector.load %arg3[%c0_9, %c0_10] : memref<8x8xf32, #tpu.memory_space<vmem>>, vector<8x8xf32>
    %c0_11 = arith.constant 0 : index
    %c0_12 = arith.constant 0 : index
    %8 = vector.load %arg4[%c0_11, %c0_12] : memref<3x8xf32, #tpu.memory_space<vmem>>, vector<1x8xf32>
    %c1_13 = arith.constant 1 : index
    %c0_14 = arith.constant 0 : index
    %9 = vector.load %arg4[%c1_13, %c0_14] : memref<3x8xf32, #tpu.memory_space<vmem>>, vector<1x8xf32>
    %c2_15 = arith.constant 2 : index
    %c0_16 = arith.constant 0 : index
    %10 = vector.load %arg4[%c2_15, %c0_16] : memref<3x8xf32, #tpu.memory_space<vmem>>, vector<1x8xf32>
    %c0_17 = arith.constant 0 : index
    %c0_18 = arith.constant 0 : index
    %11 = vector.load %arg5[%c0_17, %c0_18] : memref<8x32xf32, #tpu.memory_space<vmem>>, vector<8x32xf32>
    %12 = vector.shape_cast %0 : vector<6x32x8xf32> to vector<192x8xf32>
    %cst = arith.constant dense<0.000000e+00> : vector<192x8xf32>
    %13 = tpu.matmul %12, %7, %cst {dimension_numbers = #tpu.dot_dimension_numbers<[1], [0], [0], [1], [0, 0, 1, 1], [], []>} : vector<192x8xf32>, vector<8x8xf32>, vector<192x8xf32> -> vector<192x8xf32>
    %14 = vector.broadcast %8 : vector<1x8xf32> to vector<192x8xf32>
    %15 = arith.addf %13, %14 : vector<192x8xf32>
    %16 = vector.shape_cast %15 : vector<192x8xf32> to vector<6x32x8xf32>
    "tpu.trace_start"() <{level = 10 : i32, message = "bid,bjd->bij"}> : () -> ()
    %cst_19 = arith.constant dense<0.000000e+00> : vector<6x32x32xf32>
    %17 = tpu.matmul %16, %16, %cst_19 {dimension_numbers = #tpu.dot_dimension_numbers<[2], [2], [1], [1], [0, 0, 0, 1, 1, 1], [0], [0]>} : vector<6x32x8xf32>, vector<6x32x8xf32>, vector<6x32x32xf32> -> vector<6x32x32xf32>
    "tpu.trace_stop"() : () -> ()
    %18 = vector.shape_cast %6 : vector<32x32xf32> to vector<1x32x32xf32>
    %19 = vector.broadcast %18 : vector<1x32x32xf32> to vector<6x32x32xf32>
    %20 = arith.subf %17, %19 : vector<6x32x32xf32>
    %cst_20 = arith.constant 0.000000e+00 : f32
    %21 = vector.broadcast %cst_20 : f32 to vector<6x32x32xf32>
    %22 = arith.cmpf ogt, %20, %21 : vector<6x32x32xf32>
    %cst_21 = arith.constant 0.00999999977 : f32
    %23 = vector.broadcast %cst_21 : f32 to vector<6x32x32xf32>
    %24 = arith.mulf %23, %20 : vector<6x32x32xf32>
    %25 = arith.select %22, %20, %24 : vector<6x32x32xi1>, vector<6x32x32xf32>
    %cst_22 = arith.constant dense<0xFF800000> : vector<6x32xf32>
    %26 = vector.multi_reduction <maximumf>, %25, %cst_22 [2] : vector<6x32x32xf32> to vector<6x32xf32>
    %27 = vector.shape_cast %26 : vector<6x32xf32> to vector<6x32x1xf32>
    %28 = vector.broadcast %27 : vector<6x32x1xf32> to vector<6x32x32xf32>
    %29 = arith.subf %25, %28 : vector<6x32x32xf32>
    %30 = math.exp %29 : vector<6x32x32xf32>
    %cst_23 = arith.constant dense<0.000000e+00> : vector<6x32xf32>
    %31 = vector.multi_reduction <add>, %30, %cst_23 [2] : vector<6x32x32xf32> to vector<6x32xf32>
    %32 = vector.shape_cast %31 : vector<6x32xf32> to vector<6x32x1xf32>
    %33 = tpu.reciprocal %32 : vector<6x32x1xf32> -> vector<6x32x1xf32>
    %34 = vector.broadcast %33 : vector<6x32x1xf32> to vector<6x32x32xf32>
    %35 = arith.mulf %30, %34 : vector<6x32x32xf32>
    %36 = vector.shape_cast %2 : vector<32x32xf32> to vector<1x32x32xf32>
    %37 = vector.broadcast %36 : vector<1x32x32xf32> to vector<6x32x32xf32>
    %38 = arith.mulf %35, %37 : vector<6x32x32xf32>
    %39 = vector.shape_cast %4 : vector<32x32xf32> to vector<1x32x32xf32>
    %40 = vector.broadcast %39 : vector<1x32x32xf32> to vector<6x32x32xf32>
    %41 = arith.addf %38, %40 : vector<6x32x32xf32>
    %42 = vector.broadcast %9 : vector<1x8xf32> to vector<192x8xf32>
    %43 = arith.mulf %12, %42 : vector<192x8xf32>
    %44 = vector.broadcast %10 : vector<1x8xf32> to vector<192x8xf32>
    %45 = arith.addf %43, %44 : vector<192x8xf32>
    %46 = vector.shape_cast %45 : vector<192x8xf32> to vector<6x32x8xf32>
    "tpu.trace_start"() <{level = 10 : i32, message = "bij,bjd->bid"}> : () -> ()
    %cst_24 = arith.constant dense<0.000000e+00> : vector<6x32x8xf32>
    %47 = tpu.matmul %41, %46, %cst_24 {dimension_numbers = #tpu.dot_dimension_numbers<[2], [1], [1], [2], [0, 0, 0, 1, 1, 2], [0], [0]>} : vector<6x32x32xf32>, vector<6x32x8xf32>, vector<6x32x8xf32> -> vector<6x32x8xf32>
    "tpu.trace_stop"() : () -> ()
    %48 = vector.shape_cast %47 : vector<6x32x8xf32> to vector<192x8xf32>
    %cst_25 = arith.constant dense<0.000000e+00> : vector<192x32xf32>
    %49 = tpu.matmul %48, %11, %cst_25 {dimension_numbers = #tpu.dot_dimension_numbers<[1], [0], [0], [1], [0, 0, 1, 1], [], []>} : vector<192x8xf32>, vector<8x32xf32>, vector<192x32xf32> -> vector<192x32xf32>
    %50 = vector.shape_cast %49 : vector<192x32xf32> to vector<6x32x32xf32>
    %c0_26 = arith.constant 0 : index
    %c0_27 = arith.constant 0 : index
    %c0_28 = arith.constant 0 : index
    %51 = vector.load %arg6[%c0_26, %c0_27, %c0_28] : memref<6x32x32xf32, #tpu.memory_space<vmem>>, vector<6x32x32xf32>
    tpu.vector_store %arg6[%c0_26, %c0_27, %c0_28], %50 {strides = array<i32>} : memref<6x32x32xf32, #tpu.memory_space<vmem>>, vector<6x32x32xf32>,
    return
  }
  func.func @transform_0(%arg0: i32) -> (i32, i32, i32) {
    %c0_i32 = arith.constant 0 : i32
    %c0_i32_0 = arith.constant 0 : i32
    %c0_i32_1 = arith.constant 0 : i32
    return %arg0, %c0_i32, %c0_i32_0 : i32, i32, i32
  }
  func.func @transform_1(%arg0: i32) -> (i32, i32, i32) {
    %c0_i32 = arith.constant 0 : i32
    %c0_i32_0 = arith.constant 0 : i32
    %c0_i32_1 = arith.constant 0 : i32
    %c0_i32_2 = arith.constant 0 : i32
    return %c0_i32, %c0_i32_0, %c0_i32_1 : i32, i32, i32
  }
  func.func @transform_2(%arg0: i32) -> (i32, i32) {
    %c0_i32 = arith.constant 0 : i32
    %c0_i32_0 = arith.constant 0 : i32
    %c0_i32_1 = arith.constant 0 : i32
    return %c0_i32, %c0_i32_0 : i32, i32
  }
  func.func @transform_3(%arg0: i32) -> (i32, i32) {
    %c0_i32 = arith.constant 0 : i32
    %c0_i32_0 = arith.constant 0 : i32
    %c0_i32_1 = arith.constant 0 : i32
    return %c0_i32, %c0_i32_0 : i32, i32
  }
  func.func @transform_4(%arg0: i32) -> (i32, i32) {
    %c0_i32 = arith.constant 0 : i32
    %c0_i32_0 = arith.constant 0 : i32
    %c0_i32_1 = arith.constant 0 : i32
    return %c0_i32, %c0_i32_0 : i32, i32
  }
  func.func @transform_5(%arg0: i32) -> (i32, i32, i32) {
    %c0_i32 = arith.constant 0 : i32
    %c0_i32_0 = arith.constant 0 : i32
    %c0_i32_1 = arith.constant 0 : i32
    return %arg0, %c0_i32, %c0_i32_0 : i32, i32, i32
  }
}

</mosaic_0001>

<llo_original>
// kernel: tpu_custom_call.1
$region0: #{tpu_custom_call.1}
  #allocation0 [shape = 'u32[]', space=smem, size = 0x4, offset = 0x4, fixed_abs, tag = 'smem constant byte address 0x4 - core index']
  #allocation1 [shape = 'u32[144,128]{1,0:T(1,128)}', space=vmem, size = 0x12000, scoped, tag = 'internal scratch']
  %s0 = inlined_call_operand.vmem [shape: f32[6,32,8], index: 0, kind: input, shape index: {}]
  %s1 = inlined_call_operand.vmem [shape: f32[3,32,32], index: 1, kind: input, shape index: {}]
  %s2 = inlined_call_operand.vmem [shape: f32[8,8], index: 2, kind: input, shape index: {}]
  %s3 = inlined_call_operand.vmem [shape: f32[3,8], index: 3, kind: input, shape index: {}]
  %s4 = inlined_call_operand.vmem [shape: f32[8,32], index: 4, kind: input, shape index: {}]
  %s5 = inlined_call_operand.hbm [shape: f32[6,32,32], index: 5, kind: output, shape index: {}]
  %s6 = sld [smem:[#allocation0]]
  $region30: #{tpu_custom_call.1} parent=0
    _
  %s8 = ssub.s32 1, %s6
  %s9 = scalar_select 0, %s8, %s6
  $region1: #{tpu_custom_call.1} parent=0
    #allocation2 [shape = 'u8[98304]{0}', space=vmem, size = 0x18000, scoped, tag = 'output window, operand 0, single buffered']
    #allocation3 [shape = 's32[1]{0}', space=sflag, size = 0x4, scoped, tag = 'scoped memory for tpu_custom_call.1']
    %10 = vsyncpa [#allocation3], 0
    // Predicated region
    $region2: #{tpu_custom_call.1} parent=1 // pred_check
      _
    $region3: #{tpu_custom_call.1} parent=1 // pred_check_branch
      %12 = sbr.rel (0) target = $region5
    $region4: #{tpu_custom_call.1} parent=1 // pred_region
      _
    $region5: #{tpu_custom_call.1} parent=1 // pred_fallthru
      _
    // Predicated region
    $region6: #{tpu_custom_call.1} parent=1 // pred_check
      _
    $region7: #{tpu_custom_call.1} parent=1 // pred_check_branch
      %14 = sbr.rel (0) target = $region9
    $region8: #{tpu_custom_call.1} parent=1 // pred_region
      _
    $region9: #{tpu_custom_call.1} parent=1 // pred_fallthru
      _
    // Predicated region
    $region10: #{tpu_custom_call.1} parent=1 // pred_check
      _
    $region11: #{tpu_custom_call.1} parent=1 // pred_check_branch
      %16 = sbr.rel (0) target = $region13
    $region12: #{tpu_custom_call.1} parent=1 // pred_region
      _
    $region13: #{tpu_custom_call.1} parent=1 // pred_fallthru
      _
    // Predicated region
    $region14: #{tpu_custom_call.1} parent=1 // pred_check
      _
    $region15: #{tpu_custom_call.1} parent=1 // pred_check_branch
      %18 = sbr.rel (0) target = $region17
    $region16: #{tpu_custom_call.1} parent=1 // pred_region
      _
    $region17: #{tpu_custom_call.1} parent=1 // pred_fallthru
      _
    // Predicated region
    $region18: #{tpu_custom_call.1} parent=1 // pred_check
      _
    $region19: #{tpu_custom_call.1} parent=1 // pred_check_branch
      %20 = sbr.rel (0) target = $region21
    $region20: #{tpu_custom_call.1} parent=1 // pred_region
      _
    $region21: #{tpu_custom_call.1} parent=1 // pred_fallthru
      _
    %v21 = vld [vmem:[%s0] sm:$0xff]
    %v22 = vld [vmem:[%s0 + $0x8] sm:$0xff]
    %v23 = vld [vmem:[%s0 + $0x10] sm:$0xff]
    %v24 = vld [vmem:[%s0 + $0x18] sm:$0xff]
    %v25 = vld [vmem:[%s0 + $0x20] sm:$0xff]
    %v26 = vld [vmem:[%s0 + $0x28] sm:$0xff]
    %v27 = vld [vmem:[%s0 + $0x30] sm:$0xff]
    %v28 = vld [vmem:[%s0 + $0x38] sm:$0xff]
    %v29 = vld [vmem:[%s0 + $0x40] sm:$0xff]
    %v30 = vld [vmem:[%s0 + $0x48] sm:$0xff]
    %v31 = vld [vmem:[%s0 + $0x50] sm:$0xff]
    %v32 = vld [vmem:[%s0 + $0x58] sm:$0xff]
    %v33 = vld [vmem:[%s0 + $0x60] sm:$0xff]
    %v34 = vld [vmem:[%s0 + $0x68] sm:$0xff]
    %v35 = vld [vmem:[%s0 + $0x70] sm:$0xff]
    %v36 = vld [vmem:[%s0 + $0x78] sm:$0xff]
    %v37 = vld [vmem:[%s0 + $0x80] sm:$0xff]
    %v38 = vld [vmem:[%s0 + $0x88] sm:$0xff]
    %v39 = vld [vmem:[%s0 + $0x90] sm:$0xff]
    %v40 = vld [vmem:[%s0 + $0x98] sm:$0xff]
    %v41 = vld [vmem:[%s0 + $0xa0] sm:$0xff]
    %v42 = vld [vmem:[%s0 + $0xa8] sm:$0xff]
    %v43 = vld [vmem:[%s0 + $0xb0] sm:$0xff]
    %v44 = vld [vmem:[%s0 + $0xb8] sm:$0xff]
    %v45 = vld [vmem:[%s1] sm:$0xff]
    %v46 = vld [vmem:[%s1 + $0x8] sm:$0xff]
    %v47 = vld [vmem:[%s1 + $0x10] sm:$0xff]
    %v48 = vld [vmem:[%s1 + $0x18] sm:$0xff]
    %s49 = scalar_lea.vmem %s1, 32
    %v50 = vld [vmem:[%s49] sm:$0xff]
    %v51 = vld [vmem:[%s49 + $0x8] sm:$0xff]
    %v52 = vld [vmem:[%s49 + $0x10] sm:$0xff]
    %v53 = vld [vmem:[%s49 + $0x18] sm:$0xff]
    %s54 = scalar_lea.vmem %s1, 64
    %v55 = vld [vmem:[%s54] sm:$0xff]
    %v56 = vld [vmem:[%s54 + $0x8] sm:$0xff]
    %v57 = vld [vmem:[%s54 + $0x10] sm:$0xff]
    %v58 = vld [vmem:[%s54 + $0x18] sm:$0xff]
    %v59 = vld [vmem:[%s2] sm:$0xff]
    %v60 = vld [vmem:[%s3] sm:$0x1]
    %v61 = vld [vmem:[%s3 + $0x1] sm:$0x1]
    %v62 = vld [vmem:[%s3 + $0x2] sm:$0x1]
    %v63 = vld [vmem:[%s4] sm:$0xff]
    %v64 = vlaneseq
    %v65 = vshrl.u32 %v64, 7
    %v66 = vsub.s32 0, %v65
    %v67 = vrot.slane %v60, %v66
    %vm68 = vcmask 64512
    %v70 = vsel %vm68, %v21, 0
    %v73 = vsel %vm68, %v22, 0
    %v76 = vsel %vm68, %v23, 0
    %v79 = vsel %vm68, %v24, 0
    %v82 = vsel %vm68, %v25, 0
    %v85 = vsel %vm68, %v26, 0
    %v88 = vsel %vm68, %v27, 0
    %v91 = vsel %vm68, %v28, 0
    %v94 = vsel %vm68, %v29, 0
    %v97 = vsel %vm68, %v30, 0
    %v100 = vsel %vm68, %v31, 0
    %v103 = vsel %vm68, %v32, 0
    %v106 = vsel %vm68, %v33, 0
    %v109 = vsel %vm68, %v34, 0
    %v112 = vsel %vm68, %v35, 0
    %v115 = vsel %vm68, %v36, 0
    %v118 = vsel %vm68, %v37, 0
    %v121 = vsel %vm68, %v38, 0
    %v124 = vsel %vm68, %v39, 0
    %v127 = vsel %vm68, %v40, 0
    %v130 = vsel %vm68, %v41, 0
    %v133 = vsel %vm68, %v42, 0
    %v136 = vsel %vm68, %v43, 0
    %v139 = vsel %vm68, %v44, 0
    %141 = vmatprep.subr.mxu0 0.0
    %142 = vmatpush1.msra.mxu0 0.0
    %143 = vmatprep.subr.mxu0 0.0
    %144 = vmatpush1.msra.mxu0 0.0
    %145 = vmatprep.subr.mxu0 0.0
    %146 = vmatpush1.msra.mxu0 0.0
    %147 = vmatprep.subr.mxu0 0.0
    %148 = vmatpush1.msra.mxu0 0.0
    %149 = vmatprep.subr.mxu0 0.0
    %150 = vmatpush1.msra.mxu0 0.0
    %151 = vmatprep.subr.mxu0 0.0
    %152 = vmatpush1.msra.mxu0 0.0
    %153 = vmatprep.subr.mxu0 0.0
    %154 = vmatpush1.msra.mxu0 0.0
    %155 = vmatprep.subr.mxu0 0.0
    %156 = vmatpush1.msra.mxu0 0.0
    %157 = vmatprep.subr.mxu0 0.0
    %158 = vmatpush1.msra.mxu0 0.0
    %159 = vmatprep.subr.mxu0 0.0
    %160 = vmatpush1.msra.mxu0 0.0
    %161 = vmatprep.subr.mxu0 0.0
    %162 = vmatpush1.msra.mxu0 0.0
    %163 = vmatprep.subr.mxu0 0.0
    %164 = vmatpush1.msra.mxu0 0.0
    %165 = vmatprep.subr.mxu0 0.0
    %166 = vmatpush1.msra.mxu0 0.0
    %167 = vmatprep.subr.mxu0 0.0
    %168 = vmatpush1.msra.mxu0 0.0
    %169 = vmatprep.subr.mxu0 0.0
    %170 = vmatpush1.msra.mxu0 0.0
    %171 = vmatprep.subr.mxu0 0.0
    %172 = vmatpush1.msra.mxu0 %v59
    %173 = vmatprep.subr.mxu0 0.0
    %174 = vmatpush2.msra.mxu0 0.0
    %175 = vmatprep.subr.mxu0 0.0
    %176 = vmatpush2.msra.mxu0 0.0
    %177 = vmatprep.subr.mxu0 0.0
    %178 = vmatpush2.msra.mxu0 0.0
    %179 = vmatprep.subr.mxu0 0.0
    %180 = vmatpush2.msra.mxu0 0.0
    %181 = vmatprep.subr.mxu0 0.0
    %182 = vmatpush2.msra.mxu0 0.0
    %183 = vmatprep.subr.mxu0 0.0
    %184 = vmatpush2.msra.mxu0 0.0
    %185 = vmatprep.subr.mxu0 0.0
    %186 = vmatpush2.msra.mxu0 0.0
    %187 = vmatprep.subr.mxu0 0.0
    %188 = vmatpush2.msra.mxu0 0.0
    %189 = vmatprep.subr.mxu0 0.0
    %190 = vmatpush2.msra.mxu0 0.0
    %191 = vmatprep.subr.mxu0 0.0
    %192 = vmatpush2.msra.mxu0 0.0
    %193 = vmatprep.subr.mxu0 0.0
    %194 = vmatpush2.msra.mxu0 0.0
    %195 = vmatprep.subr.mxu0 0.0
    %196 = vmatpush2.msra.mxu0 0.0
    %197 = vmatprep.subr.mxu0 0.0
    %198 = vmatpush2.msra.mxu0 0.0
    %199 = vmatprep.subr.mxu0 0.0
    %200 = vmatpush2.msra.mxu0 0.0
    %201 = vmatprep.subr.mxu0 0.0
    %202 = vmatpush2.msra.mxu0 0.0
    %203 = vmatprep.subr.mxu0 0.0
    %204 = vmatpush2.msra.mxu0 0.0
    %205 = vmatprep.mubr.f32.mxu0 0.0
    %206 = vmatmul.mubr.f32.gmra.mxu0 %v70
    %v207 = vpop.f32.mrf.mxu0
    %v208 = vadd.f32 %v67, %v207
    %v209 = vpop.f32.mrf.mxu0
    %210 = vmatprep.mubr.f32.mxu0 0.0
    %211 = vmatmul.mubr.f32.gmra.mxu0 %v73
    %v212 = vpop.f32.mrf.mxu0
    %v213 = vadd.f32 %v67, %v212
    %v214 = vpop.f32.mrf.mxu0
    %215 = vmatprep.mubr.f32.mxu0 0.0
    %216 = vmatmul.mubr.f32.gmra.mxu0 %v76
    %v217 = vpop.f32.mrf.mxu0
    %v218 = vadd.f32 %v67, %v217
    %v219 = vpop.f32.mrf.mxu0
    %220 = vmatprep.mubr.f32.mxu0 0.0
    %221 = vmatmul.mubr.f32.gmra.mxu0 %v79
    %v222 = vpop.f32.mrf.mxu0
    %v223 = vadd.f32 %v67, %v222
    %v224 = vpop.f32.mrf.mxu0
    %225 = vmatprep.mubr.f32.mxu0 0.0
    %226 = vmatmul.mubr.f32.gmra.mxu0 %v82
    %v227 = vpop.f32.mrf.mxu0
    %v228 = vadd.f32 %v67, %v227
    %v229 = vpop.f32.mrf.mxu0
    %230 = vmatprep.mubr.f32.mxu0 0.0
    %231 = vmatmul.mubr.f32.gmra.mxu0 %v85
    %v232 = vpop.f32.mrf.mxu0
    %v233 = vadd.f32 %v67, %v232
    %v234 = vpop.f32.mrf.mxu0
    %235 = vmatprep.mubr.f32.mxu0 0.0
    %236 = vmatmul.mubr.f32.gmra.mxu0 %v88
    %v237 = vpop.f32.mrf.mxu0
    %v238 = vadd.f32 %v67, %v237
    %v239 = vpop.f32.mrf.mxu0
    %240 = vmatprep.mubr.f32.mxu0 0.0
    %241 = vmatmul.mubr.f32.gmra.mxu0 %v91
    %v242 = vpop.f32.mrf.mxu0
    %v243 = vadd.f32 %v67, %v242
    %v244 = vpop.f32.mrf.mxu0
    %245 = vmatprep.mubr.f32.mxu0 0.0
    %246 = vmatmul.mubr.f32.gmra.mxu0 %v94
    %v247 = vpop.f32.mrf.mxu0
    %v248 = vadd.f32 %v67, %v247
    %v249 = vpop.f32.mrf.mxu0
    %250 = vmatprep.mubr.f32.mxu0 0.0
    %251 = vmatmul.mubr.f32.gmra.mxu0 %v97
    %v252 = vpop.f32.mrf.mxu0
    %v253 = vadd.f32 %v67, %v252
    %v254 = vpop.f32.mrf.mxu0
    %255 = vmatprep.mubr.f32.mxu0 0.0
    %256 = vmatmul.mubr.f32.gmra.mxu0 %v100
    %v257 = vpop.f32.mrf.mxu0
    %v258 = vadd.f32 %v67, %v257
    %v259 = vpop.f32.mrf.mxu0
    %260 = vmatprep.mubr.f32.mxu0 0.0
    %261 = vmatmul.mubr.f32.gmra.mxu0 %v103
    %v262 = vpop.f32.mrf.mxu0
    %v263 = vadd.f32 %v67, %v262
    %v264 = vpop.f32.mrf.mxu0
    %265 = vmatprep.mubr.f32.mxu0 0.0
    %266 = vmatmul.mubr.f32.gmra.mxu0 %v106
    %v267 = vpop.f32.mrf.mxu0
    %v268 = vadd.f32 %v67, %v267
    %v269 = vpop.f32.mrf.mxu0
    %270 = vmatprep.mubr.f32.mxu0 0.0
    %271 = vmatmul.mubr.f32.gmra.mxu0 %v109
    %v272 = vpop.f32.mrf.mxu0
    %v273 = vadd.f32 %v67, %v272
    %v274 = vpop.f32.mrf.mxu0
    %275 = vmatprep.mubr.f32.mxu0 0.0
    %276 = vmatmul.mubr.f32.gmra.mxu0 %v112
    %v277 = vpop.f32.mrf.mxu0
    %v278 = vadd.f32 %v67, %v277
    %v279 = vpop.f32.mrf.mxu0
    %280 = vmatprep.mubr.f32.mxu0 0.0
    %281 = vmatmul.mubr.f32.gmra.mxu0 %v115
    %v282 = vpop.f32.mrf.mxu0
    %v283 = vadd.f32 %v67, %v282
    %v284 = vpop.f32.mrf.mxu0
    %285 = vmatprep.mubr.f32.mxu0 0.0
    %286 = vmatmul.mubr.f32.gmra.mxu0 %v118
    %v287 = vpop.f32.mrf.mxu0
    %v288 = vadd.f32 %v67, %v287
    %v289 = vpop.f32.mrf.mxu0
    %290 = vmatprep.mubr.f32.mxu0 0.0
    %291 = vmatmul.mubr.f32.gmra.mxu0 %v121
    %v292 = vpop.f32.mrf.mxu0
    %v293 = vadd.f32 %v67, %v292
    %v294 = vpop.f32.mrf.mxu0
    %295 = vmatprep.mubr.f32.mxu0 0.0
    %296 = vmatmul.mubr.f32.gmra.mxu0 %v124
    %v297 = vpop.f32.mrf.mxu0
    %v298 = vadd.f32 %v67, %v297
    %v299 = vpop.f32.mrf.mxu0
    %300 = vmatprep.mubr.f32.mxu0 0.0
    %301 = vmatmul.mubr.f32.gmra.mxu0 %v127
    %v302 = vpop.f32.mrf.mxu0
    %v303 = vadd.f32 %v67, %v302
    %v304 = vpop.f32.mrf.mxu0
    %305 = vmatprep.mubr.f32.mxu0 0.0
    %306 = vmatmul.mubr.f32.gmra.mxu0 %v130
    %v307 = vpop.f32.mrf.mxu0
    %v308 = vadd.f32 %v67, %v307
    %v309 = vpop.f32.mrf.mxu0
    %310 = vmatprep.mubr.f32.mxu0 0.0
    %311 = vmatmul.mubr.f32.gmra.mxu0 %v133
    %v312 = vpop.f32.mrf.mxu0
    %v313 = vadd.f32 %v67, %v312
    %v314 = vpop.f32.mrf.mxu0
    %315 = vmatprep.mubr.f32.mxu0 0.0
    %316 = vmatmul.mubr.f32.gmra.mxu0 %v136
    %v317 = vpop.f32.mrf.mxu0
    %v318 = vadd.f32 %v67, %v317
    %v319 = vpop.f32.mrf.mxu0
    %320 = vmatprep.mubr.f32.mxu0 0.0
    %321 = vmatmul.mubr.f32.gmra.mxu0 %v139
    %v322 = vpop.f32.mrf.mxu0
    %v323 = vadd.f32 %v67, %v322
    %v324 = vpop.f32.mrf.mxu0
    %325 = vdwg.mxu0
    %v327 = vsel %vm68, %v208, 0
    %v330 = vsel %vm68, %v213, 0
    %v333 = vsel %vm68, %v218, 0
    %v336 = vsel %vm68, %v223, 0
    %338 = vmatprep.subr.mxu0 0.0
    %339 = vmatpush1.xpose.msra.mxu0 0.0
    %340 = vmatprep.subr.mxu0 0.0
    %341 = vmatpush1.xpose.msra.mxu0 0.0
    %342 = vmatprep.subr.mxu0 0.0
    %343 = vmatpush1.xpose.msra.mxu0 0.0
    %344 = vmatprep.subr.mxu0 0.0
    %345 = vmatpush1.xpose.msra.mxu0 0.0
    %346 = vmatprep.subr.mxu0 0.0
    %347 = vmatpush1.xpose.msra.mxu0 0.0
    %348 = vmatprep.subr.mxu0 0.0
    %349 = vmatpush1.xpose.msra.mxu0 0.0
    %350 = vmatprep.subr.mxu0 0.0
    %351 = vmatpush1.xpose.msra.mxu0 0.0
    %352 = vmatprep.subr.mxu0 0.0
    %353 = vmatpush1.xpose.msra.mxu0 0.0
    %354 = vmatprep.subr.mxu0 0.0
    %355 = vmatpush1.xpose.msra.mxu0 0.0
    %356 = vmatprep.subr.mxu0 0.0
    %357 = vmatpush1.xpose.msra.mxu0 0.0
    %358 = vmatprep.subr.mxu0 0.0
    %359 = vmatpush1.xpose.msra.mxu0 0.0
    %360 = vmatprep.subr.mxu0 0.0
    %361 = vmatpush1.xpose.msra.mxu0 0.0
    %362 = vmatprep.subr.mxu0 0.0
    %363 = vmatpush1.xpose.msra.mxu0 %v336
    %364 = vmatprep.subr.mxu0 0.0
    %365 = vmatpush1.xpose.msra.mxu0 %v333
    %366 = vmatprep.subr.mxu0 0.0
    %367 = vmatpush1.xpose.msra.mxu0 %v330
    %368 = vmatprep.subr.mxu0 0.0
    %369 = vmatpush1.xpose.msra.mxu0 %v327
    %370 = vmatprep.subr.mxu0 0.0
    %371 = vmatpush2.xpose.msra.mxu0 0.0
    %372 = vmatprep.subr.mxu0 0.0
    %373 = vmatpush2.xpose.msra.mxu0 0.0
    %374 = vmatprep.subr.mxu0 0.0
    %375 = vmatpush2.xpose.msra.mxu0 0.0
    %376 = vmatprep.subr.mxu0 0.0
    %377 = vmatpush2.xpose.msra.mxu0 0.0
    %378 = vmatprep.subr.mxu0 0.0
    %379 = vmatpush2.xpose.msra.mxu0 0.0
    %380 = vmatprep.subr.mxu0 0.0
    %381 = vmatpush2.xpose.msra.mxu0 0.0
    %382 = vmatprep.subr.mxu0 0.0
    %383 = vmatpush2.xpose.msra.mxu0 0.0
    %384 = vmatprep.subr.mxu0 0.0
    %385 = vmatpush2.xpose.msra.mxu0 0.0
    %386 = vmatprep.subr.mxu0 0.0
    %387 = vmatpush2.xpose.msra.mxu0 0.0
    %388 = vmatprep.subr.mxu0 0.0
    %389 = vmatpush2.xpose.msra.mxu0 0.0
    %390 = vmatprep.subr.mxu0 0.0
    %391 = vmatpush2.xpose.msra.mxu0 0.0
    %392 = vmatprep.subr.mxu0 0.0
    %393 = vmatpush2.xpose.msra.mxu0 0.0
    %394 = vmatprep.subr.mxu0 0.0
    %395 = vmatpush2.xpose.msra.mxu0 0.0
    %396 = vmatprep.subr.mxu0 0.0
    %397 = vmatpush2.xpose.msra.mxu0 0.0
    %398 = vmatprep.subr.mxu0 0.0
    %399 = vmatpush2.xpose.msra.mxu0 0.0
    %400 = vmatprep.subr.mxu0 0.0
    %401 = vmatpush2.xpose.msra.mxu0 0.0
    %402 = vmatprep.mubr.f32.mxu0 0.0
    %403 = vmatmul.mubr.f32.gmra.mxu0 %v327
    %v404 = vpop.f32.mrf.mxu0
    %v405 = vadd.f32 0.0, %v404
    %v406 = vpop.f32.mrf.mxu0
    %407 = vmatprep.mubr.f32.mxu0 0.0
    %408 = vmatmul.mubr.f32.gmra.mxu0 %v330
    %v409 = vpop.f32.mrf.mxu0
    %v410 = vadd.f32 0.0, %v409
    %v411 = vpop.f32.mrf.mxu0
    %412 = vmatprep.mubr.f32.mxu0 0.0
    %413 = vmatmul.mubr.f32.gmra.mxu0 %v333
    %v414 = vpop.f32.mrf.mxu0
    %v415 = vadd.f32 0.0, %v414
    %v416 = vpop.f32.mrf.mxu0
    %417 = vmatprep.mubr.f32.mxu0 0.0
    %418 = vmatmul.mubr.f32.gmra.mxu0 %v336
    %v419 = vpop.f32.mrf.mxu0
    %v420 = vadd.f32 0.0, %v419
    %v421 = vpop.f32.mrf.mxu0
    %422 = vdwg.mxu0
    %v424 = vsel %vm68, %v228, 0
    %v427 = vsel %vm68, %v233, 0
    %v430 = vsel %vm68, %v238, 0
    %v433 = vsel %vm68, %v243, 0
    %435 = vmatprep.subr.mxu0 0.0
    %436 = vmatpush1.xpose.msra.mxu0 0.0
    %437 = vmatprep.subr.mxu0 0.0
    %438 = vmatpush1.xpose.msra.mxu0 0.0
    %439 = vmatprep.subr.mxu0 0.0
    %440 = vmatpush1.xpose.msra.mxu0 0.0
    %441 = vmatprep.subr.mxu0 0.0
    %442 = vmatpush1.xpose.msra.mxu0 0.0
    %443 = vmatprep.subr.mxu0 0.0
    %444 = vmatpush1.xpose.msra.mxu0 0.0
    %445 = vmatprep.subr.mxu0 0.0
    %446 = vmatpush1.xpose.msra.mxu0 0.0
    %447 = vmatprep.subr.mxu0 0.0
    %448 = vmatpush1.xpose.msra.mxu0 0.0
    %449 = vmatprep.subr.mxu0 0.0
    %450 = vmatpush1.xpose.msra.mxu0 0.0
    %451 = vmatprep.subr.mxu0 0.0
    %452 = vmatpush1.xpose.msra.mxu0 0.0
    %453 = vmatprep.subr.mxu0 0.0
    %454 = vmatpush1.xpose.msra.mxu0 0.0
    %455 = vmatprep.subr.mxu0 0.0
    %456 = vmatpush1.xpose.msra.mxu0 0.0
    %457 = vmatprep.subr.mxu0 0.0
    %458 = vmatpush1.xpose.msra.mxu0 0.0
    %459 = vmatprep.subr.mxu0 0.0
    %460 = vmatpush1.xpose.msra.mxu0 %v433
    %461 = vmatprep.subr.mxu0 0.0
    %462 = vmatpush1.xpose.msra.mxu0 %v430
    %463 = vmatprep.subr.mxu0 0.0
    %464 = vmatpush1.xpose.msra.mxu0 %v427
    %465 = vmatprep.subr.mxu0 0.0
    %466 = vmatpush1.xpose.msra.mxu0 %v424
    %467 = vmatprep.subr.mxu0 0.0
    %468 = vmatpush2.xpose.msra.mxu0 0.0
    %469 = vmatprep.subr.mxu0 0.0
    %470 = vmatpush2.xpose.msra.mxu0 0.0
    %471 = vmatprep.subr.mxu0 0.0
    %472 = vmatpush2.xpose.msra.mxu0 0.0
    %473 = vmatprep.subr.mxu0 0.0
    %474 = vmatpush2.xpose.msra.mxu0 0.0
    %475 = vmatprep.subr.mxu0 0.0
    %476 = vmatpush2.xpose.msra.mxu0 0.0
    %477 = vmatprep.subr.mxu0 0.0
    %478 = vmatpush2.xpose.msra.mxu0 0.0
    %479 = vmatprep.subr.mxu0 0.0
    %480 = vmatpush2.xpose.msra.mxu0 0.0
    %481 = vmatprep.subr.mxu0 0.0
    %482 = vmatpush2.xpose.msra.mxu0 0.0
    %483 = vmatprep.subr.mxu0 0.0
    %484 = vmatpush2.xpose.msra.mxu0 0.0
    %485 = vmatprep.subr.mxu0 0.0
    %486 = vmatpush2.xpose.msra.mxu0 0.0
    %487 = vmatprep.subr.mxu0 0.0
    %488 = vmatpush2.xpose.msra.mxu0 0.0
    %489 = vmatprep.subr.mxu0 0.0
    %490 = vmatpush2.xpose.msra.mxu0 0.0
    %491 = vmatprep.subr.mxu0 0.0
    %492 = vmatpush2.xpose.msra.mxu0 0.0
    %493 = vmatprep.subr.mxu0 0.0
    %494 = vmatpush2.xpose.msra.mxu0 0.0
    %495 = vmatprep.subr.mxu0 0.0
    %496 = vmatpush2.xpose.msra.mxu0 0.0
    %497 = vmatprep.subr.mxu0 0.0
    %498 = vmatpush2.xpose.msra.mxu0 0.0
    %499 = vmatprep.mubr.f32.mxu0 0.0
    %500 = vmatmul.mubr.f32.gmra.mxu0 %v424
    %v501 = vpop.f32.mrf.mxu0
    %v502 = vadd.f32 0.0, %v501
    %v503 = vpop.f32.mrf.mxu0
    %504 = vmatprep.mubr.f32.mxu0 0.0
    %505 = vmatmul.mubr.f32.gmra.mxu0 %v427
    %v506 = vpop.f32.mrf.mxu0
    %v507 = vadd.f32 0.0, %v506
    %v508 = vpop.f32.mrf.mxu0
    %509 = vmatprep.mubr.f32.mxu0 0.0
    %510 = vmatmul.mubr.f32.gmra.mxu0 %v430
    %v511 = vpop.f32.mrf.mxu0
    %v512 = vadd.f32 0.0, %v511
    %v513 = vpop.f32.mrf.mxu0
    %514 = vmatprep.mubr.f32.mxu0 0.0
    %515 = vmatmul.mubr.f32.gmra.mxu0 %v433
    %v516 = vpop.f32.mrf.mxu0
    %v517 = vadd.f32 0.0, %v516
    %v518 = vpop.f32.mrf.mxu0
    %519 = vdwg.mxu0
    %v521 = vsel %vm68, %v248, 0
    %v524 = vsel %vm68, %v253, 0
    %v527 = vsel %vm68, %v258, 0
    %v530 = vsel %vm68, %v263, 0
    %532 = vmatprep.subr.mxu0 0.0
    %533 = vmatpush1.xpose.msra.mxu0 0.0
    %534 = vmatprep.subr.mxu0 0.0
    %535 = vmatpush1.xpose.msra.mxu0 0.0
    %536 = vmatprep.subr.mxu0 0.0
    %537 = vmatpush1.xpose.msra.mxu0 0.0
    %538 = vmatprep.subr.mxu0 0.0
    %539 = vmatpush1.xpose.msra.mxu0 0.0
    %540 = vmatprep.subr.mxu0 0.0
    %541 = vmatpush1.xpose.msra.mxu0 0.0
    %542 = vmatprep.subr.mxu0 0.0
    %543 = vmatpush1.xpose.msra.mxu0 0.0
    %544 = vmatprep.subr.mxu0 0.0
    %545 = vmatpush1.xpose.msra.mxu0 0.0
    %546 = vmatprep.subr.mxu0 0.0
    %547 = vmatpush1.xpose.msra.mxu0 0.0
    %548 = vmatprep.subr.mxu0 0.0
    %549 = vmatpush1.xpose.msra.mxu0 0.0
    %550 = vmatprep.subr.mxu0 0.0
    %551 = vmatpush1.xpose.msra.mxu0 0.0
    %552 = vmatprep.subr.mxu0 0.0
    %553 = vmatpush1.xpose.msra.mxu0 0.0
    %554 = vmatprep.subr.mxu0 0.0
    %555 = vmatpush1.xpose.msra.mxu0 0.0
    %556 = vmatprep.subr.mxu0 0.0
    %557 = vmatpush1.xpose.msra.mxu0 %v530
    %558 = vmatprep.subr.mxu0 0.0
    %559 = vmatpush1.xpose.msra.mxu0 %v527
    %560 = vmatprep.subr.mxu0 0.0
    %561 = vmatpush1.xpose.msra.mxu0 %v524
    %562 = vmatprep.subr.mxu0 0.0
    %563 = vmatpush1.xpose.msra.mxu0 %v521
    %564 = vmatprep.subr.mxu0 0.0
    %565 = vmatpush2.xpose.msra.mxu0 0.0
    %566 = vmatprep.subr.mxu0 0.0
    %567 = vmatpush2.xpose.msra.mxu0 0.0
    %568 = vmatprep.subr.mxu0 0.0
    %569 = vmatpush2.xpose.msra.mxu0 0.0
    %570 = vmatprep.subr.mxu0 0.0
    %571 = vmatpush2.xpose.msra.mxu0 0.0
    %572 = vmatprep.subr.mxu0 0.0
    %573 = vmatpush2.xpose.msra.mxu0 0.0
    %574 = vmatprep.subr.mxu0 0.0
    %575 = vmatpush2.xpose.msra.mxu0 0.0
    %576 = vmatprep.subr.mxu0 0.0
    %577 = vmatpush2.xpose.msra.mxu0 0.0
    %578 = vmatprep.subr.mxu0 0.0
    %579 = vmatpush2.xpose.msra.mxu0 0.0
    %580 = vmatprep.subr.mxu0 0.0
    %581 = vmatpush2.xpose.msra.mxu0 0.0
    %582 = vmatprep.subr.mxu0 0.0
    %583 = vmatpush2.xpose.msra.mxu0 0.0
    %584 = vmatprep.subr.mxu0 0.0
    %585 = vmatpush2.xpose.msra.mxu0 0.0
    %586 = vmatprep.subr.mxu0 0.0
    %587 = vmatpush2.xpose.msra.mxu0 0.0
    %588 = vmatprep.subr.mxu0 0.0
    %589 = vmatpush2.xpose.msra.mxu0 0.0
    %590 = vmatprep.subr.mxu0 0.0
    %591 = vmatpush2.xpose.msra.mxu0 0.0
    %592 = vmatprep.subr.mxu0 0.0
    %593 = vmatpush2.xpose.msra.mxu0 0.0
    %594 = vmatprep.subr.mxu0 0.0
    %595 = vmatpush2.xpose.msra.mxu0 0.0
    %596 = vmatprep.mubr.f32.mxu0 0.0
    %597 = vmatmul.mubr.f32.gmra.mxu0 %v521
    %v598 = vpop.f32.mrf.mxu0
    %v599 = vadd.f32 0.0, %v598
    %v600 = vpop.f32.mrf.mxu0
    %601 = vmatprep.mubr.f32.mxu0 0.0
    %602 = vmatmul.mubr.f32.gmra.mxu0 %v524
    %v603 = vpop.f32.mrf.mxu0
    %v604 = vadd.f32 0.0, %v603
    %v605 = vpop.f32.mrf.mxu0
    %606 = vmatprep.mubr.f32.mxu0 0.0
    %607 = vmatmul.mubr.f32.gmra.mxu0 %v527
    %v608 = vpop.f32.mrf.mxu0
    %v609 = vadd.f32 0.0, %v608
    %v610 = vpop.f32.mrf.mxu0
    %611 = vmatprep.mubr.f32.mxu0 0.0
    %612 = vmatmul.mubr.f32.gmra.mxu0 %v530
    %v613 = vpop.f32.mrf.mxu0
    %v614 = vadd.f32 0.0, %v613
    %v615 = vpop.f32.mrf.mxu0
    %616 = vdwg.mxu0
    %v618 = vsel %vm68, %v268, 0
    %v621 = vsel %vm68, %v273, 0
    %v624 = vsel %vm68, %v278, 0
    %v627 = vsel %vm68, %v283, 0
    %629 = vmatprep.subr.mxu0 0.0
    %630 = vmatpush1.xpose.msra.mxu0 0.0
    %631 = vmatprep.subr.mxu0 0.0
    %632 = vmatpush1.xpose.msra.mxu0 0.0
    %633 = vmatprep.subr.mxu0 0.0
    %634 = vmatpush1.xpose.msra.mxu0 0.0
    %635 = vmatprep.subr.mxu0 0.0
    %636 = vmatpush1.xpose.msra.mxu0 0.0
    %637 = vmatprep.subr.mxu0 0.0
    %638 = vmatpush1.xpose.msra.mxu0 0.0
    %639 = vmatprep.subr.mxu0 0.0
    %640 = vmatpush1.xpose.msra.mxu0 0.0
    %641 = vmatprep.subr.mxu0 0.0
    %642 = vmatpush1.xpose.msra.mxu0 0.0
    %643 = vmatprep.subr.mxu0 0.0
    %644 = vmatpush1.xpose.msra.mxu0 0.0
    %645 = vmatprep.subr.mxu0 0.0
    %646 = vmatpush1.xpose.msra.mxu0 0.0
    %647 = vmatprep.subr.mxu0 0.0
    %648 = vmatpush1.xpose.msra.mxu0 0.0
    %649 = vmatprep.subr.mxu0 0.0
    %650 = vmatpush1.xpose.msra.mxu0 0.0
    %651 = vmatprep.subr.mxu0 0.0
    %652 = vmatpush1.xpose.msra.mxu0 0.0
    %653 = vmatprep.subr.mxu0 0.0
    %654 = vmatpush1.xpose.msra.mxu0 %v627
    %655 = vmatprep.subr.mxu0 0.0
    %656 = vmatpush1.xpose.msra.mxu0 %v624
    %657 = vmatprep.subr.mxu0 0.0
    %658 = vmatpush1.xpose.msra.mxu0 %v621
    %659 = vmatprep.subr.mxu0 0.0
    %660 = vmatpush1.xpose.msra.mxu0 %v618
    %661 = vmatprep.subr.mxu0 0.0
    %662 = vmatpush2.xpose.msra.mxu0 0.0
    %663 = vmatprep.subr.mxu0 0.0
    %664 = vmatpush2.xpose.msra.mxu0 0.0
    %665 = vmatprep.subr.mxu0 0.0
    %666 = vmatpush2.xpose.msra.mxu0 0.0
    %667 = vmatprep.subr.mxu0 0.0
    %668 = vmatpush2.xpose.msra.mxu0 0.0
    %669 = vmatprep.subr.mxu0 0.0
    %670 = vmatpush2.xpose.msra.mxu0 0.0
    %671 = vmatprep.subr.mxu0 0.0
    %672 = vmatpush2.xpose.msra.mxu0 0.0
    %673 = vmatprep.subr.mxu0 0.0
    %674 = vmatpush2.xpose.msra.mxu0 0.0
    %675 = vmatprep.subr.mxu0 0.0
    %676 = vmatpush2.xpose.msra.mxu0 0.0
    %677 = vmatprep.subr.mxu0 0.0
    %678 = vmatpush2.xpose.msra.mxu0 0.0
    %679 = vmatprep.subr.mxu0 0.0
    %680 = vmatpush2.xpose.msra.mxu0 0.0
    %681 = vmatprep.subr.mxu0 0.0
    %682 = vmatpush2.xpose.msra.mxu0 0.0
    %683 = vmatprep.subr.mxu0 0.0
    %684 = vmatpush2.xpose.msra.mxu0 0.0
    %685 = vmatprep.subr.mxu0 0.0
    %686 = vmatpush2.xpose.msra.mxu0 0.0
    %687 = vmatprep.subr.mxu0 0.0
    %688 = vmatpush2.xpose.msra.mxu0 0.0
    %689 = vmatprep.subr.mxu0 0.0
    %690 = vmatpush2.xpose.msra.mxu0 0.0
    %691 = vmatprep.subr.mxu0 0.0
    %692 = vmatpush2.xpose.msra.mxu0 0.0
    %693 = vmatprep.mubr.f32.mxu0 0.0
    %694 = vmatmul.mubr.f32.gmra.mxu0 %v618
    %v695 = vpop.f32.mrf.mxu0
    %v696 = vadd.f32 0.0, %v695
    %v697 = vpop.f32.mrf.mxu0
    %698 = vmatprep.mubr.f32.mxu0 0.0
    %699 = vmatmul.mubr.f32.gmra.mxu0 %v621
    %v700 = vpop.f32.mrf.mxu0
    %v701 = vadd.f32 0.0, %v700
    %v702 = vpop.f32.mrf.mxu0
    %703 = vmatprep.mubr.f32.mxu0 0.0
    %704 = vmatmul.mubr.f32.gmra.mxu0 %v624
    %v705 = vpop.f32.mrf.mxu0
    %v706 = vadd.f32 0.0, %v705
    %v707 = vpop.f32.mrf.mxu0
    %708 = vmatprep.mubr.f32.mxu0 0.0
    %709 = vmatmul.mubr.f32.gmra.mxu0 %v627
    %v710 = vpop.f32.mrf.mxu0
    %v711 = vadd.f32 0.0, %v710
    %v712 = vpop.f32.mrf.mxu0
    %713 = vdwg.mxu0
    %v715 = vsel %vm68, %v288, 0
    %v718 = vsel %vm68, %v293, 0
    %v721 = vsel %vm68, %v298, 0
    %v724 = vsel %vm68, %v303, 0
    %726 = vmatprep.subr.mxu0 0.0
    %727 = vmatpush1.xpose.msra.mxu0 0.0
    %728 = vmatprep.subr.mxu0 0.0
    %729 = vmatpush1.xpose.msra.mxu0 0.0
    %730 = vmatprep.subr.mxu0 0.0
    %731 = vmatpush1.xpose.msra.mxu0 0.0
    %732 = vmatprep.subr.mxu0 0.0
    %733 = vmatpush1.xpose.msra.mxu0 0.0
    %734 = vmatprep.subr.mxu0 0.0
    %735 = vmatpush1.xpose.msra.mxu0 0.0
    %736 = vmatprep.subr.mxu0 0.0
    %737 = vmatpush1.xpose.msra.mxu0 0.0
    %738 = vmatprep.subr.mxu0 0.0
    %739 = vmatpush1.xpose.msra.mxu0 0.0
    %740 = vmatprep.subr.mxu0 0.0
    %741 = vmatpush1.xpose.msra.mxu0 0.0
    %742 = vmatprep.subr.mxu0 0.0
    %743 = vmatpush1.xpose.msra.mxu0 0.0
    %744 = vmatprep.subr.mxu0 0.0
    %745 = vmatpush1.xpose.msra.mxu0 0.0
    %746 = vmatprep.subr.mxu0 0.0
    %747 = vmatpush1.xpose.msra.mxu0 0.0
    %748 = vmatprep.subr.mxu0 0.0
    %749 = vmatpush1.xpose.msra.mxu0 0.0
    %750 = vmatprep.subr.mxu0 0.0
    %751 = vmatpush1.xpose.msra.mxu0 %v724
    %752 = vmatprep.subr.mxu0 0.0
    %753 = vmatpush1.xpose.msra.mxu0 %v721
    %754 = vmatprep.subr.mxu0 0.0
    %755 = vmatpush1.xpose.msra.mxu0 %v718
    %756 = vmatprep.subr.mxu0 0.0
    %757 = vmatpush1.xpose.msra.mxu0 %v715
    %758 = vmatprep.subr.mxu0 0.0
    %759 = vmatpush2.xpose.msra.mxu0 0.0
    %760 = vmatprep.subr.mxu0 0.0
    %761 = vmatpush2.xpose.msra.mxu0 0.0
    %762 = vmatprep.subr.mxu0 0.0
    %763 = vmatpush2.xpose.msra.mxu0 0.0
    %764 = vmatprep.subr.mxu0 0.0
    %765 = vmatpush2.xpose.msra.mxu0 0.0
    %766 = vmatprep.subr.mxu0 0.0
    %767 = vmatpush2.xpose.msra.mxu0 0.0
    %768 = vmatprep.subr.mxu0 0.0
    %769 = vmatpush2.xpose.msra.mxu0 0.0
    %770 = vmatprep.subr.mxu0 0.0
    %771 = vmatpush2.xpose.msra.mxu0 0.0
    %772 = vmatprep.subr.mxu0 0.0
    %773 = vmatpush2.xpose.msra.mxu0 0.0
    %774 = vmatprep.subr.mxu0 0.0
    %775 = vmatpush2.xpose.msra.mxu0 0.0
    %776 = vmatprep.subr.mxu0 0.0
    %777 = vmatpush2.xpose.msra.mxu0 0.0
    %778 = vmatprep.subr.mxu0 0.0
    %779 = vmatpush2.xpose.msra.mxu0 0.0
    %780 = vmatprep.subr.mxu0 0.0
    %781 = vmatpush2.xpose.msra.mxu0 0.0
    %782 = vmatprep.subr.mxu0 0.0
    %783 = vmatpush2.xpose.msra.mxu0 0.0
    %784 = vmatprep.subr.mxu0 0.0
    %785 = vmatpush2.xpose.msra.mxu0 0.0
    %786 = vmatprep.subr.mxu0 0.0
    %787 = vmatpush2.xpose.msra.mxu0 0.0
    %788 = vmatprep.subr.mxu0 0.0
    %789 = vmatpush2.xpose.msra.mxu0 0.0
    %790 = vmatprep.mubr.f32.mxu0 0.0
    %791 = vmatmul.mubr.f32.gmra.mxu0 %v715
    %v792 = vpop.f32.mrf.mxu0
    %v793 = vadd.f32 0.0, %v792
    %v794 = vpop.f32.mrf.mxu0
    %795 = vmatprep.mubr.f32.mxu0 0.0
    %796 = vmatmul.mubr.f32.gmra.mxu0 %v718
    %v797 = vpop.f32.mrf.mxu0
    %v798 = vadd.f32 0.0, %v797
    %v799 = vpop.f32.mrf.mxu0
    %800 = vmatprep.mubr.f32.mxu0 0.0
    %801 = vmatmul.mubr.f32.gmra.mxu0 %v721
    %v802 = vpop.f32.mrf.mxu0
    %v803 = vadd.f32 0.0, %v802
    %v804 = vpop.f32.mrf.mxu0
    %805 = vmatprep.mubr.f32.mxu0 0.0
    %806 = vmatmul.mubr.f32.gmra.mxu0 %v724
    %v807 = vpop.f32.mrf.mxu0
    %v808 = vadd.f32 0.0, %v807
    %v809 = vpop.f32.mrf.mxu0
    %810 = vdwg.mxu0
    %v812 = vsel %vm68, %v308, 0
    %v815 = vsel %vm68, %v313, 0
    %v818 = vsel %vm68, %v318, 0
    %v821 = vsel %vm68, %v323, 0
    %823 = vmatprep.subr.mxu0 0.0
    %824 = vmatpush1.xpose.msra.mxu0 0.0
    %825 = vmatprep.subr.mxu0 0.0
    %826 = vmatpush1.xpose.msra.mxu0 0.0
    %827 = vmatprep.subr.mxu0 0.0
    %828 = vmatpush1.xpose.msra.mxu0 0.0
    %829 = vmatprep.subr.mxu0 0.0
    %830 = vmatpush1.xpose.msra.mxu0 0.0
    %831 = vmatprep.subr.mxu0 0.0
    %832 = vmatpush1.xpose.msra.mxu0 0.0
    %833 = vmatprep.subr.mxu0 0.0
    %834 = vmatpush1.xpose.msra.mxu0 0.0
    %835 = vmatprep.subr.mxu0 0.0
    %836 = vmatpush1.xpose.msra.mxu0 0.0
    %837 = vmatprep.subr.mxu0 0.0
    %838 = vmatpush1.xpose.msra.mxu0 0.0
    %839 = vmatprep.subr.mxu0 0.0
    %840 = vmatpush1.xpose.msra.mxu0 0.0
    %841 = vmatprep.subr.mxu0 0.0
    %842 = vmatpush1.xpose.msra.mxu0 0.0
    %843 = vmatprep.subr.mxu0 0.0
    %844 = vmatpush1.xpose.msra.mxu0 0.0
    %845 = vmatprep.subr.mxu0 0.0
    %846 = vmatpush1.xpose.msra.mxu0 0.0
    %847 = vmatprep.subr.mxu0 0.0
    %848 = vmatpush1.xpose.msra.mxu0 %v821
    %849 = vmatprep.subr.mxu0 0.0
    %850 = vmatpush1.xpose.msra.mxu0 %v818
    %851 = vmatprep.subr.mxu0 0.0
    %852 = vmatpush1.xpose.msra.mxu0 %v815
    %853 = vmatprep.subr.mxu0 0.0
    %854 = vmatpush1.xpose.msra.mxu0 %v812
    %855 = vmatprep.subr.mxu0 0.0
    %856 = vmatpush2.xpose.msra.mxu0 0.0
    %857 = vmatprep.subr.mxu0 0.0
    %858 = vmatpush2.xpose.msra.mxu0 0.0
    %859 = vmatprep.subr.mxu0 0.0
    %860 = vmatpush2.xpose.msra.mxu0 0.0
    %861 = vmatprep.subr.mxu0 0.0
    %862 = vmatpush2.xpose.msra.mxu0 0.0
    %863 = vmatprep.subr.mxu0 0.0
    %864 = vmatpush2.xpose.msra.mxu0 0.0
    %865 = vmatprep.subr.mxu0 0.0
    %866 = vmatpush2.xpose.msra.mxu0 0.0
    %867 = vmatprep.subr.mxu0 0.0
    %868 = vmatpush2.xpose.msra.mxu0 0.0
    %869 = vmatprep.subr.mxu0 0.0
    %870 = vmatpush2.xpose.msra.mxu0 0.0
    %871 = vmatprep.subr.mxu0 0.0
    %872 = vmatpush2.xpose.msra.mxu0 0.0
    %873 = vmatprep.subr.mxu0 0.0
    %874 = vmatpush2.xpose.msra.mxu0 0.0
    %875 = vmatprep.subr.mxu0 0.0
    %876 = vmatpush2.xpose.msra.mxu0 0.0
    %877 = vmatprep.subr.mxu0 0.0
    %878 = vmatpush2.xpose.msra.mxu0 0.0
    %879 = vmatprep.subr.mxu0 0.0
    %880 = vmatpush2.xpose.msra.mxu0 0.0
    %881 = vmatprep.subr.mxu0 0.0
    %882 = vmatpush2.xpose.msra.mxu0 0.0
    %883 = vmatprep.subr.mxu0 0.0
    %884 = vmatpush2.xpose.msra.mxu0 0.0
    %885 = vmatprep.subr.mxu0 0.0
    %886 = vmatpush2.xpose.msra.mxu0 0.0
    %887 = vmatprep.mubr.f32.mxu0 0.0
    %888 = vmatmul.mubr.f32.gmra.mxu0 %v812
    %v889 = vpop.f32.mrf.mxu0
    %v890 = vadd.f32 0.0, %v889
    %v891 = vpop.f32.mrf.mxu0
    %892 = vmatprep.mubr.f32.mxu0 0.0
    %893 = vmatmul.mubr.f32.gmra.mxu0 %v815
    %v894 = vpop.f32.mrf.mxu0
    %v895 = vadd.f32 0.0, %v894
    %v896 = vpop.f32.mrf.mxu0
    %897 = vmatprep.mubr.f32.mxu0 0.0
    %898 = vmatmul.mubr.f32.gmra.mxu0 %v818
    %v899 = vpop.f32.mrf.mxu0
    %v900 = vadd.f32 0.0, %v899
    %v901 = vpop.f32.mrf.mxu0
    %902 = vmatprep.mubr.f32.mxu0 0.0
    %903 = vmatmul.mubr.f32.gmra.mxu0 %v821
    %v904 = vpop.f32.mrf.mxu0
    %v905 = vadd.f32 0.0, %v904
    %v906 = vpop.f32.mrf.mxu0
    %907 = vdwg.mxu0
    %v908 = vsub.f32 %v405, %v55
    %v909 = vsub.f32 %v410, %v56
    %v910 = vsub.f32 %v415, %v57
    %v911 = vsub.f32 %v420, %v58
    %v912 = vsub.f32 %v502, %v55
    %v913 = vsub.f32 %v507, %v56
    %v914 = vsub.f32 %v512, %v57
    %v915 = vsub.f32 %v517, %v58
    %v916 = vsub.f32 %v599, %v55
    %v917 = vsub.f32 %v604, %v56
    %v918 = vsub.f32 %v609, %v57
    %v919 = vsub.f32 %v614, %v58
    %v920 = vsub.f32 %v696, %v55
    %v921 = vsub.f32 %v701, %v56
    %v922 = vsub.f32 %v706, %v57
    %v923 = vsub.f32 %v711, %v58
    %v924 = vsub.f32 %v793, %v55
    %v925 = vsub.f32 %v798, %v56
    %v926 = vsub.f32 %v803, %v57
    %v927 = vsub.f32 %v808, %v58
    %v928 = vsub.f32 %v890, %v55
    %v929 = vsub.f32 %v895, %v56
    %v930 = vsub.f32 %v900, %v57
    %v931 = vsub.f32 %v905, %v58
    %vm932 = vcmp.gt.f32.partialorder %v908, 0.0
    %vm933 = vcmp.gt.f32.partialorder %v909, 0.0
    %vm934 = vcmp.gt.f32.partialorder %v910, 0.0
    %vm935 = vcmp.gt.f32.partialorder %v911, 0.0
    %vm936 = vcmp.gt.f32.partialorder %v912, 0.0
    %vm937 = vcmp.gt.f32.partialorder %v913, 0.0
    %vm938 = vcmp.gt.f32.partialorder %v914, 0.0
    %vm939 = vcmp.gt.f32.partialorder %v915, 0.0
    %vm940 = vcmp.gt.f32.partialorder %v916, 0.0
    %vm941 = vcmp.gt.f32.partialorder %v917, 0.0
    %vm942 = vcmp.gt.f32.partialorder %v918, 0.0
    %vm943 = vcmp.gt.f32.partialorder %v919, 0.0
    %vm944 = vcmp.gt.f32.partialorder %v920, 0.0
    %vm945 = vcmp.gt.f32.partialorder %v921, 0.0
    %vm946 = vcmp.gt.f32.partialorder %v922, 0.0
    %vm947 = vcmp.gt.f32.partialorder %v923, 0.0
    %vm948 = vcmp.gt.f32.partialorder %v924, 0.0
    %vm949 = vcmp.gt.f32.partialorder %v925, 0.0
    %vm950 = vcmp.gt.f32.partialorder %v926, 0.0
    %vm951 = vcmp.gt.f32.partialorder %v927, 0.0
    %vm952 = vcmp.gt.f32.partialorder %v928, 0.0
    %vm953 = vcmp.gt.f32.partialorder %v929, 0.0
    %vm954 = vcmp.gt.f32.partialorder %v930, 0.0
    %vm955 = vcmp.gt.f32.partialorder %v931, 0.0
    %v956 = vmul.f32 %v908, 0.01
    %v957 = vmul.f32 %v909, 0.01
    %v958 = vmul.f32 %v910, 0.01
    %v959 = vmul.f32 %v911, 0.01
    %v960 = vmul.f32 %v912, 0.01
    %v961 = vmul.f32 %v913, 0.01
    %v962 = vmul.f32 %v914, 0.01
    %v963 = vmul.f32 %v915, 0.01
    %v964 = vmul.f32 %v916, 0.01
    %v965 = vmul.f32 %v917, 0.01
    %v966 = vmul.f32 %v918, 0.01
    %v967 = vmul.f32 %v919, 0.01
    %v968 = vmul.f32 %v920, 0.01
    %v969 = vmul.f32 %v921, 0.01
    %v970 = vmul.f32 %v922, 0.01
    %v971 = vmul.f32 %v923, 0.01
    %v972 = vmul.f32 %v924, 0.01
    %v973 = vmul.f32 %v925, 0.01
    %v974 = vmul.f32 %v926, 0.01
    %v975 = vmul.f32 %v927, 0.01
    %v976 = vmul.f32 %v928, 0.01
    %v977 = vmul.f32 %v929, 0.01
    %v978 = vmul.f32 %v930, 0.01
    %v979 = vmul.f32 %v931, 0.01
    %v980 = vsel %vm932, %v908, %v956
    %v981 = vsel %vm933, %v909, %v957
    %v982 = vsel %vm934, %v910, %v958
    %v983 = vsel %vm935, %v911, %v959
    %v984 = vsel %vm936, %v912, %v960
    %v985 = vsel %vm937, %v913, %v961
    %v986 = vsel %vm938, %v914, %v962
    %v987 = vsel %vm939, %v915, %v963
    %v988 = vsel %vm940, %v916, %v964
    %v989 = vsel %vm941, %v917, %v965
    %v990 = vsel %vm942, %v918, %v966
    %v991 = vsel %vm943, %v919, %v967
    %v992 = vsel %vm944, %v920, %v968
    %v993 = vsel %vm945, %v921, %v969
    %v994 = vsel %vm946, %v922, %v970
    %v995 = vsel %vm947, %v923, %v971
    %v996 = vsel %vm948, %v924, %v972
    %v997 = vsel %vm949, %v925, %v973
    %v998 = vsel %vm950, %v926, %v974
    %v999 = vsel %vm951, %v927, %v975
    %v1000 = vsel %vm952, %v928, %v976
    %v1001 = vsel %vm953, %v929, %v977
    %v1002 = vsel %vm954, %v930, %v978
    %v1003 = vsel %vm955, %v931, %v979
    %vm1004 = vcmask 261120
    %v1005 = vsel %vm1004, %v980, -inf
    %1006 = vmax.xlane.f32.xlu0 %v1005
    %v1007 = vpop.xlane.xlu0 %1006
    %v1008 = vsel %vm1004, %v981, -inf
    %1009 = vmax.xlane.f32.xlu0 %v1008
    %v1010 = vpop.xlane.xlu0 %1009
    %v1011 = vsel %vm1004, %v982, -inf
    %1012 = vmax.xlane.f32.xlu0 %v1011
    %v1013 = vpop.xlane.xlu0 %1012
    %v1014 = vsel %vm1004, %v983, -inf
    %1015 = vmax.xlane.f32.xlu0 %v1014
    %v1016 = vpop.xlane.xlu0 %1015
    %v1017 = vsel %vm1004, %v984, -inf
    %1018 = vmax.xlane.f32.xlu0 %v1017
    %v1019 = vpop.xlane.xlu0 %1018
    %v1020 = vsel %vm1004, %v985, -inf
    %1021 = vmax.xlane.f32.xlu0 %v1020
    %v1022 = vpop.xlane.xlu0 %1021
    %v1023 = vsel %vm1004, %v986, -inf
    %1024 = vmax.xlane.f32.xlu0 %v1023
    %v1025 = vpop.xlane.xlu0 %1024
    %v1026 = vsel %vm1004, %v987, -inf
    %1027 = vmax.xlane.f32.xlu0 %v1026
    %v1028 = vpop.xlane.xlu0 %1027
    %v1029 = vsel %vm1004, %v988, -inf
    %1030 = vmax.xlane.f32.xlu0 %v1029
    %v1031 = vpop.xlane.xlu0 %1030
    %v1032 = vsel %vm1004, %v989, -inf
    %1033 = vmax.xlane.f32.xlu0 %v1032
    %v1034 = vpop.xlane.xlu0 %1033
    %v1035 = vsel %vm1004, %v990, -inf
    %1036 = vmax.xlane.f32.xlu0 %v1035
    %v1037 = vpop.xlane.xlu0 %1036
    %v1038 = vsel %vm1004, %v991, -inf
    %1039 = vmax.xlane.f32.xlu0 %v1038
    %v1040 = vpop.xlane.xlu0 %1039
    %v1041 = vsel %vm1004, %v992, -inf
    %1042 = vmax.xlane.f32.xlu0 %v1041
    %v1043 = vpop.xlane.xlu0 %1042
    %v1044 = vsel %vm1004, %v993, -inf
    %1045 = vmax.xlane.f32.xlu0 %v1044
    %v1046 = vpop.xlane.xlu0 %1045
    %v1047 = vsel %vm1004, %v994, -inf
    %1048 = vmax.xlane.f32.xlu0 %v1047
    %v1049 = vpop.xlane.xlu0 %1048
    %v1050 = vsel %vm1004, %v995, -inf
    %1051 = vmax.xlane.f32.xlu0 %v1050
    %v1052 = vpop.xlane.xlu0 %1051
    %v1053 = vsel %vm1004, %v996, -inf
    %1054 = vmax.xlane.f32.xlu0 %v1053
    %v1055 = vpop.xlane.xlu0 %1054
    %v1056 = vsel %vm1004, %v997, -inf
    %1057 = vmax.xlane.f32.xlu0 %v1056
    %v1058 = vpop.xlane.xlu0 %1057
    %v1059 = vsel %vm1004, %v998, -inf
    %1060 = vmax.xlane.f32.xlu0 %v1059
    %v1061 = vpop.xlane.xlu0 %1060
    %v1062 = vsel %vm1004, %v999, -inf
    %1063 = vmax.xlane.f32.xlu0 %v1062
    %v1064 = vpop.xlane.xlu0 %1063
    %v1065 = vsel %vm1004, %v1000, -inf
    %1066 = vmax.xlane.f32.xlu0 %v1065
    %v1067 = vpop.xlane.xlu0 %1066
    %v1068 = vsel %vm1004, %v1001, -inf
    %1069 = vmax.xlane.f32.xlu0 %v1068
    %v1070 = vpop.xlane.xlu0 %1069
    %v1071 = vsel %vm1004, %v1002, -inf
    %1072 = vmax.xlane.f32.xlu0 %v1071
    %v1073 = vpop.xlane.xlu0 %1072
    %v1074 = vsel %vm1004, %v1003, -inf
    %1075 = vmax.xlane.f32.xlu0 %v1074
    %v1076 = vpop.xlane.xlu0 %1075
    %v1077 = vsub.f32 %v980, %v1007
    %v1078 = vsub.f32 %v981, %v1010
    %v1079 = vsub.f32 %v982, %v1013
    %v1080 = vsub.f32 %v983, %v1016
    %v1081 = vsub.f32 %v984, %v1019
    %v1082 = vsub.f32 %v985, %v1022
    %v1083 = vsub.f32 %v986, %v1025
    %v1084 = vsub.f32 %v987, %v1028
    %v1085 = vsub.f32 %v988, %v1031
    %v1086 = vsub.f32 %v989, %v1034
    %v1087 = vsub.f32 %v990, %v1037
    %v1088 = vsub.f32 %v991, %v1040
    %v1089 = vsub.f32 %v992, %v1043
    %v1090 = vsub.f32 %v993, %v1046
    %v1091 = vsub.f32 %v994, %v1049
    %v1092 = vsub.f32 %v995, %v1052
    %v1093 = vsub.f32 %v996, %v1055
    %v1094 = vsub.f32 %v997, %v1058
    %v1095 = vsub.f32 %v998, %v1061
    %v1096 = vsub.f32 %v999, %v1064
    %v1097 = vsub.f32 %v1000, %v1067
    %v1098 = vsub.f32 %v1001, %v1070
    %v1099 = vsub.f32 %v1002, %v1073
    %v1100 = vsub.f32 %v1003, %v1076
    %v1101 = vmul.f32 %v1077, 1.442695
    %v1102 = vpow.pop %v1101
    %v1103 = vmul.f32 %v1078, 1.442695
    %v1104 = vpow.pop %v1103
    %v1105 = vmul.f32 %v1079, 1.442695
    %v1106 = vpow.pop %v1105
    %v1107 = vmul.f32 %v1080, 1.442695
    %v1108 = vpow.pop %v1107
    %v1109 = vmul.f32 %v1081, 1.442695
    %v1110 = vpow.pop %v1109
    %v1111 = vmul.f32 %v1082, 1.442695
    %v1112 = vpow.pop %v1111
    %v1113 = vmul.f32 %v1083, 1.442695
    %v1114 = vpow.pop %v1113
    %v1115 = vmul.f32 %v1084, 1.442695
    %v1116 = vpow.pop %v1115
    %v1117 = vmul.f32 %v1085, 1.442695
    %v1118 = vpow.pop %v1117
    %v1119 = vmul.f32 %v1086, 1.442695
    %v1120 = vpow.pop %v1119
    %v1121 = vmul.f32 %v1087, 1.442695
    %v1122 = vpow.pop %v1121
    %v1123 = vmul.f32 %v1088, 1.442695
    %v1124 = vpow.pop %v1123
    %v1125 = vmul.f32 %v1089, 1.442695
    %v1126 = vpow.pop %v1125
    %v1127 = vmul.f32 %v1090, 1.442695
    %v1128 = vpow.pop %v1127
    %v1129 = vmul.f32 %v1091, 1.442695
    %v1130 = vpow.pop %v1129
    %v1131 = vmul.f32 %v1092, 1.442695
    %v1132 = vpow.pop %v1131
    %v1133 = vmul.f32 %v1093, 1.442695
    %v1134 = vpow.pop %v1133
    %v1135 = vmul.f32 %v1094, 1.442695
    %v1136 = vpow.pop %v1135
    %v1137 = vmul.f32 %v1095, 1.442695
    %v1138 = vpow.pop %v1137
    %v1139 = vmul.f32 %v1096, 1.442695
    %v1140 = vpow.pop %v1139
    %v1141 = vmul.f32 %v1097, 1.442695
    %v1142 = vpow.pop %v1141
    %v1143 = vmul.f32 %v1098, 1.442695
    %v1144 = vpow.pop %v1143
    %v1145 = vmul.f32 %v1099, 1.442695
    %v1146 = vpow.pop %v1145
    %v1147 = vmul.f32 %v1100, 1.442695
    %v1148 = vpow.pop %v1147
    %v1149 = vsel %vm1004, %v1102, 0.0
    %1150 = vadd.xlane.f32.xlu0 %v1149
    %v1151 = vpop.xlane.xlu0 %1150
    %v1152 = vsel %vm1004, %v1104, 0.0
    %1153 = vadd.xlane.f32.xlu0 %v1152
    %v1154 = vpop.xlane.xlu0 %1153
    %v1155 = vsel %vm1004, %v1106, 0.0
    %1156 = vadd.xlane.f32.xlu0 %v1155
    %v1157 = vpop.xlane.xlu0 %1156
    %v1158 = vsel %vm1004, %v1108, 0.0
    %1159 = vadd.xlane.f32.xlu0 %v1158
    %v1160 = vpop.xlane.xlu0 %1159
    %v1161 = vsel %vm1004, %v1110, 0.0
    %1162 = vadd.xlane.f32.xlu0 %v1161
    %v1163 = vpop.xlane.xlu0 %1162
    %v1164 = vsel %vm1004, %v1112, 0.0
    %1165 = vadd.xlane.f32.xlu0 %v1164
    %v1166 = vpop.xlane.xlu0 %1165
    %v1167 = vsel %vm1004, %v1114, 0.0
    %1168 = vadd.xlane.f32.xlu0 %v1167
    %v1169 = vpop.xlane.xlu0 %1168
    %v1170 = vsel %vm1004, %v1116, 0.0
    %1171 = vadd.xlane.f32.xlu0 %v1170
    %v1172 = vpop.xlane.xlu0 %1171
    %v1173 = vsel %vm1004, %v1118, 0.0
    %1174 = vadd.xlane.f32.xlu0 %v1173
    %v1175 = vpop.xlane.xlu0 %1174
    %v1176 = vsel %vm1004, %v1120, 0.0
    %1177 = vadd.xlane.f32.xlu0 %v1176
    %v1178 = vpop.xlane.xlu0 %1177
    %v1179 = vsel %vm1004, %v1122, 0.0
    %1180 = vadd.xlane.f32.xlu0 %v1179
    %v1181 = vpop.xlane.xlu0 %1180
    %v1182 = vsel %vm1004, %v1124, 0.0
    %1183 = vadd.xlane.f32.xlu0 %v1182
    %v1184 = vpop.xlane.xlu0 %1183
    %v1185 = vsel %vm1004, %v1126, 0.0
    %1186 = vadd.xlane.f32.xlu0 %v1185
    %v1187 = vpop.xlane.xlu0 %1186
    %v1188 = vsel %vm1004, %v1128, 0.0
    %1189 = vadd.xlane.f32.xlu0 %v1188
    %v1190 = vpop.xlane.xlu0 %1189
    %v1191 = vsel %vm1004, %v1130, 0.0
    %1192 = vadd.xlane.f32.xlu0 %v1191
    %v1193 = vpop.xlane.xlu0 %1192
    %v1194 = vsel %vm1004, %v1132, 0.0
    %1195 = vadd.xlane.f32.xlu0 %v1194
    %v1196 = vpop.xlane.xlu0 %1195
    %v1197 = vsel %vm1004, %v1134, 0.0
    %1198 = vadd.xlane.f32.xlu0 %v1197
    %v1199 = vpop.xlane.xlu0 %1198
    %v1200 = vsel %vm1004, %v1136, 0.0
    %1201 = vadd.xlane.f32.xlu0 %v1200
    %v1202 = vpop.xlane.xlu0 %1201
    %v1203 = vsel %vm1004, %v1138, 0.0
    %1204 = vadd.xlane.f32.xlu0 %v1203
    %v1205 = vpop.xlane.xlu0 %1204
    %v1206 = vsel %vm1004, %v1140, 0.0
    %1207 = vadd.xlane.f32.xlu0 %v1206
    %v1208 = vpop.xlane.xlu0 %1207
    %v1209 = vsel %vm1004, %v1142, 0.0
    %1210 = vadd.xlane.f32.xlu0 %v1209
    %v1211 = vpop.xlane.xlu0 %1210
    %v1212 = vsel %vm1004, %v1144, 0.0
    %1213 = vadd.xlane.f32.xlu0 %v1212
    %v1214 = vpop.xlane.xlu0 %1213
    %v1215 = vsel %vm1004, %v1146, 0.0
    %1216 = vadd.xlane.f32.xlu0 %v1215
    %v1217 = vpop.xlane.xlu0 %1216
    %v1218 = vsel %vm1004, %v1148, 0.0
    %1219 = vadd.xlane.f32.xlu0 %v1218
    %v1220 = vpop.xlane.xlu0 %1219
    %v1221 = vrcp.pop %v1151
    %v1222 = vrcp.pop %v1154
    %v1223 = vrcp.pop %v1157
    %v1224 = vrcp.pop %v1160
    %v1225 = vrcp.pop %v1163
    %v1226 = vrcp.pop %v1166
    %v1227 = vrcp.pop %v1169
    %v1228 = vrcp.pop %v1172
    %v1229 = vrcp.pop %v1175
    %v1230 = vrcp.pop %v1178
    %v1231 = vrcp.pop %v1181
    %v1232 = vrcp.pop %v1184
    %v1233 = vrcp.pop %v1187
    %v1234 = vrcp.pop %v1190
    %v1235 = vrcp.pop %v1193
    %v1236 = vrcp.pop %v1196
    %v1237 = vrcp.pop %v1199
    %v1238 = vrcp.pop %v1202
    %v1239 = vrcp.pop %v1205
    %v1240 = vrcp.pop %v1208
    %v1241 = vrcp.pop %v1211
    %v1242 = vrcp.pop %v1214
    %v1243 = vrcp.pop %v1217
    %v1244 = vrcp.pop %v1220
    %v1245 = vmul.f32 %v1102, %v1221
    %v1246 = vmul.f32 %v1104, %v1222
    %v1247 = vmul.f32 %v1106, %v1223
    %v1248 = vmul.f32 %v1108, %v1224
    %v1249 = vmul.f32 %v1110, %v1225
    %v1250 = vmul.f32 %v1112, %v1226
    %v1251 = vmul.f32 %v1114, %v1227
    %v1252 = vmul.f32 %v1116, %v1228
    %v1253 = vmul.f32 %v1118, %v1229
    %v1254 = vmul.f32 %v1120, %v1230
    %v1255 = vmul.f32 %v1122, %v1231
    %v1256 = vmul.f32 %v1124, %v1232
    %v1257 = vmul.f32 %v1126, %v1233
    %v1258 = vmul.f32 %v1128, %v1234
    %v1259 = vmul.f32 %v1130, %v1235
    %v1260 = vmul.f32 %v1132, %v1236
    %v1261 = vmul.f32 %v1134, %v1237
    %v1262 = vmul.f32 %v1136, %v1238
    %v1263 = vmul.f32 %v1138, %v1239
    %v1264 = vmul.f32 %v1140, %v1240
    %v1265 = vmul.f32 %v1142, %v1241
    %v1266 = vmul.f32 %v1144, %v1242
    %v1267 = vmul.f32 %v1146, %v1243
    %v1268 = vmul.f32 %v1148, %v1244
    %v1269 = vmul.f32 %v1245, %v45
    %v1270 = vmul.f32 %v1246, %v46
    %v1271 = vmul.f32 %v1247, %v47
    %v1272 = vmul.f32 %v1248, %v48
    %v1273 = vmul.f32 %v1249, %v45
    %v1274 = vmul.f32 %v1250, %v46
    %v1275 = vmul.f32 %v1251, %v47
    %v1276 = vmul.f32 %v1252, %v48
    %v1277 = vmul.f32 %v1253, %v45
    %v1278 = vmul.f32 %v1254, %v46
    %v1279 = vmul.f32 %v1255, %v47
    %v1280 = vmul.f32 %v1256, %v48
    %v1281 = vmul.f32 %v1257, %v45
    %v1282 = vmul.f32 %v1258, %v46
    %v1283 = vmul.f32 %v1259, %v47
    %v1284 = vmul.f32 %v1260, %v48
    %v1285 = vmul.f32 %v1261, %v45
    %v1286 = vmul.f32 %v1262, %v46
    %v1287 = vmul.f32 %v1263, %v47
    %v1288 = vmul.f32 %v1264, %v48
    %v1289 = vmul.f32 %v1265, %v45
    %v1290 = vmul.f32 %v1266, %v46
    %v1291 = vmul.f32 %v1267, %v47
    %v1292 = vmul.f32 %v1268, %v48
    %v1293 = vadd.f32 %v1269, %v50
    %v1294 = vadd.f32 %v1270, %v51
    %v1295 = vadd.f32 %v1271, %v52
    %v1296 = vadd.f32 %v1272, %v53
    %v1297 = vadd.f32 %v1273, %v50
    %v1298 = vadd.f32 %v1274, %v51
    %v1299 = vadd.f32 %v1275, %v52
    %v1300 = vadd.f32 %v1276, %v53
    %v1301 = vadd.f32 %v1277, %v50
    %v1302 = vadd.f32 %v1278, %v51
    %v1303 = vadd.f32 %v1279, %v52
    %v1304 = vadd.f32 %v1280, %v53
    %v1305 = vadd.f32 %v1281, %v50
    %v1306 = vadd.f32 %v1282, %v51
    %v1307 = vadd.f32 %v1283, %v52
    %v1308 = vadd.f32 %v1284, %v53
    %v1309 = vadd.f32 %v1285, %v50
    %v1310 = vadd.f32 %v1286, %v51
    %v1311 = vadd.f32 %v1287, %v52
    %v1312 = vadd.f32 %v1288, %v53
    %v1313 = vadd.f32 %v1289, %v50
    %v1314 = vadd.f32 %v1290, %v51
    %v1315 = vadd.f32 %v1291, %v52
    %v1316 = vadd.f32 %v1292, %v53
    %v1317 = vlaneseq
    %v1318 = vshrl.u32 %v1317, 7
    %v1319 = vsub.s32 0, %v1318
    %v1320 = vrot.slane %v61, %v1319
    %v1321 = vmul.f32 %v21, %v1320
    %v1322 = vmul.f32 %v22, %v1320
    %v1323 = vmul.f32 %v23, %v1320
    %v1324 = vmul.f32 %v24, %v1320
    %v1325 = vmul.f32 %v25, %v1320
    %v1326 = vmul.f32 %v26, %v1320
    %v1327 = vmul.f32 %v27, %v1320
    %v1328 = vmul.f32 %v28, %v1320
    %v1329 = vmul.f32 %v29, %v1320
    %v1330 = vmul.f32 %v30, %v1320
    %v1331 = vmul.f32 %v31, %v1320
    %v1332 = vmul.f32 %v32, %v1320
    %v1333 = vmul.f32 %v33, %v1320
    %v1334 = vmul.f32 %v34, %v1320
    %v1335 = vmul.f32 %v35, %v1320
    %v1336 = vmul.f32 %v36, %v1320
    %v1337 = vmul.f32 %v37, %v1320
    %v1338 = vmul.f32 %v38, %v1320
    %v1339 = vmul.f32 %v39, %v1320
    %v1340 = vmul.f32 %v40, %v1320
    %v1341 = vmul.f32 %v41, %v1320
    %v1342 = vmul.f32 %v42, %v1320
    %v1343 = vmul.f32 %v43, %v1320
    %v1344 = vmul.f32 %v44, %v1320
    %v1345 = vlaneseq
    %v1346 = vshrl.u32 %v1345, 7
    %v1347 = vsub.s32 0, %v1346
    %v1348 = vrot.slane %v62, %v1347
    %v1349 = vadd.f32 %v1321, %v1348
    %v1350 = vadd.f32 %v1322, %v1348
    %v1351 = vadd.f32 %v1323, %v1348
    %v1352 = vadd.f32 %v1324, %v1348
    %v1353 = vadd.f32 %v1325, %v1348
    %v1354 = vadd.f32 %v1326, %v1348
    %v1355 = vadd.f32 %v1327, %v1348
    %v1356 = vadd.f32 %v1328, %v1348
    %v1357 = vadd.f32 %v1329, %v1348
    %v1358 = vadd.f32 %v1330, %v1348
    %v1359 = vadd.f32 %v1331, %v1348
    %v1360 = vadd.f32 %v1332, %v1348
    %v1361 = vadd.f32 %v1333, %v1348
    %v1362 = vadd.f32 %v1334, %v1348
    %v1363 = vadd.f32 %v1335, %v1348
    %v1364 = vadd.f32 %v1336, %v1348
    %v1365 = vadd.f32 %v1337, %v1348
    %v1366 = vadd.f32 %v1338, %v1348
    %v1367 = vadd.f32 %v1339, %v1348
    %v1368 = vadd.f32 %v1340, %v1348
    %v1369 = vadd.f32 %v1341, %v1348
    %v1370 = vadd.f32 %v1342, %v1348
    %v1371 = vadd.f32 %v1343, %v1348
    %v1372 = vadd.f32 %v1344, %v1348
    %v1374 = vsel %vm1004, %v1293, 0
    %v1377 = vsel %vm1004, %v1294, 0
    %v1380 = vsel %vm1004, %v1295, 0
    %v1383 = vsel %vm1004, %v1296, 0
    %1385 = vmatprep.subr.mxu0 0.0
    %1386 = vmatpush1.msra.mxu0 0.0
    %1387 = vmatprep.subr.mxu0 0.0
    %1388 = vmatpush1.msra.mxu0 0.0
    %1389 = vmatprep.subr.mxu0 0.0
    %1390 = vmatpush1.msra.mxu0 0.0
    %1391 = vmatprep.subr.mxu0 0.0
    %1392 = vmatpush1.msra.mxu0 0.0
    %1393 = vmatprep.subr.mxu0 0.0
    %1394 = vmatpush1.msra.mxu0 0.0
    %1395 = vmatprep.subr.mxu0 0.0
    %1396 = vmatpush1.msra.mxu0 0.0
    %1397 = vmatprep.subr.mxu0 0.0
    %1398 = vmatpush1.msra.mxu0 0.0
    %1399 = vmatprep.subr.mxu0 0.0
    %1400 = vmatpush1.msra.mxu0 0.0
    %1401 = vmatprep.subr.mxu0 0.0
    %1402 = vmatpush1.msra.mxu0 0.0
    %1403 = vmatprep.subr.mxu0 0.0
    %1404 = vmatpush1.msra.mxu0 0.0
    %1405 = vmatprep.subr.mxu0 0.0
    %1406 = vmatpush1.msra.mxu0 0.0
    %1407 = vmatprep.subr.mxu0 0.0
    %1408 = vmatpush1.msra.mxu0 0.0
    %1409 = vmatprep.subr.mxu0 0.0
    %1410 = vmatpush1.msra.mxu0 %v1352
    %1411 = vmatprep.subr.mxu0 0.0
    %1412 = vmatpush1.msra.mxu0 %v1351
    %1413 = vmatprep.subr.mxu0 0.0
    %1414 = vmatpush1.msra.mxu0 %v1350
    %1415 = vmatprep.subr.mxu0 0.0
    %1416 = vmatpush1.msra.mxu0 %v1349
    %1417 = vmatprep.subr.mxu0 0.0
    %1418 = vmatpush2.msra.mxu0 0.0
    %1419 = vmatprep.subr.mxu0 0.0
    %1420 = vmatpush2.msra.mxu0 0.0
    %1421 = vmatprep.subr.mxu0 0.0
    %1422 = vmatpush2.msra.mxu0 0.0
    %1423 = vmatprep.subr.mxu0 0.0
    %1424 = vmatpush2.msra.mxu0 0.0
    %1425 = vmatprep.subr.mxu0 0.0
    %1426 = vmatpush2.msra.mxu0 0.0
    %1427 = vmatprep.subr.mxu0 0.0
    %1428 = vmatpush2.msra.mxu0 0.0
    %1429 = vmatprep.subr.mxu0 0.0
    %1430 = vmatpush2.msra.mxu0 0.0
    %1431 = vmatprep.subr.mxu0 0.0
    %1432 = vmatpush2.msra.mxu0 0.0
    %1433 = vmatprep.subr.mxu0 0.0
    %1434 = vmatpush2.msra.mxu0 0.0
    %1435 = vmatprep.subr.mxu0 0.0
    %1436 = vmatpush2.msra.mxu0 0.0
    %1437 = vmatprep.subr.mxu0 0.0
    %1438 = vmatpush2.msra.mxu0 0.0
    %1439 = vmatprep.subr.mxu0 0.0
    %1440 = vmatpush2.msra.mxu0 0.0
    %1441 = vmatprep.subr.mxu0 0.0
    %1442 = vmatpush2.msra.mxu0 0.0
    %1443 = vmatprep.subr.mxu0 0.0
    %1444 = vmatpush2.msra.mxu0 0.0
    %1445 = vmatprep.subr.mxu0 0.0
    %1446 = vmatpush2.msra.mxu0 0.0
    %1447 = vmatprep.subr.mxu0 0.0
    %1448 = vmatpush2.msra.mxu0 0.0
    %1449 = vmatprep.mubr.f32.mxu0 0.0
    %1450 = vmatmul.mubr.f32.gmra.mxu0 %v1374
    %v1451 = vpop.f32.mrf.mxu0
    %v1452 = vadd.f32 0.0, %v1451
    %v1453 = vpop.f32.mrf.mxu0
    %1454 = vmatprep.mubr.f32.mxu0 0.0
    %1455 = vmatmul.mubr.f32.gmra.mxu0 %v1377
    %v1456 = vpop.f32.mrf.mxu0
    %v1457 = vadd.f32 0.0, %v1456
    %v1458 = vpop.f32.mrf.mxu0
    %1459 = vmatprep.mubr.f32.mxu0 0.0
    %1460 = vmatmul.mubr.f32.gmra.mxu0 %v1380
    %v1461 = vpop.f32.mrf.mxu0
    %v1462 = vadd.f32 0.0, %v1461
    %v1463 = vpop.f32.mrf.mxu0
    %1464 = vmatprep.mubr.f32.mxu0 0.0
    %1465 = vmatmul.mubr.f32.gmra.mxu0 %v1383
    %v1466 = vpop.f32.mrf.mxu0
    %v1467 = vadd.f32 0.0, %v1466
    %v1468 = vpop.f32.mrf.mxu0
    %1469 = vdwg.mxu0
    %v1471 = vsel %vm1004, %v1297, 0
    %v1474 = vsel %vm1004, %v1298, 0
    %v1477 = vsel %vm1004, %v1299, 0
    %v1480 = vsel %vm1004, %v1300, 0
    %1482 = vmatprep.subr.mxu0 0.0
    %1483 = vmatpush1.msra.mxu0 0.0
    %1484 = vmatprep.subr.mxu0 0.0
    %1485 = vmatpush1.msra.mxu0 0.0
    %1486 = vmatprep.subr.mxu0 0.0
    %1487 = vmatpush1.msra.mxu0 0.0
    %1488 = vmatprep.subr.mxu0 0.0
    %1489 = vmatpush1.msra.mxu0 0.0
    %1490 = vmatprep.subr.mxu0 0.0
    %1491 = vmatpush1.msra.mxu0 0.0
    %1492 = vmatprep.subr.mxu0 0.0
    %1493 = vmatpush1.msra.mxu0 0.0
    %1494 = vmatprep.subr.mxu0 0.0
    %1495 = vmatpush1.msra.mxu0 0.0
    %1496 = vmatprep.subr.mxu0 0.0
    %1497 = vmatpush1.msra.mxu0 0.0
    %1498 = vmatprep.subr.mxu0 0.0
    %1499 = vmatpush1.msra.mxu0 0.0
    %1500 = vmatprep.subr.mxu0 0.0
    %1501 = vmatpush1.msra.mxu0 0.0
    %1502 = vmatprep.subr.mxu0 0.0
    %1503 = vmatpush1.msra.mxu0 0.0
    %1504 = vmatprep.subr.mxu0 0.0
    %1505 = vmatpush1.msra.mxu0 0.0
    %1506 = vmatprep.subr.mxu0 0.0
    %1507 = vmatpush1.msra.mxu0 %v1356
    %1508 = vmatprep.subr.mxu0 0.0
    %1509 = vmatpush1.msra.mxu0 %v1355
    %1510 = vmatprep.subr.mxu0 0.0
    %1511 = vmatpush1.msra.mxu0 %v1354
    %1512 = vmatprep.subr.mxu0 0.0
    %1513 = vmatpush1.msra.mxu0 %v1353
    %1514 = vmatprep.subr.mxu0 0.0
    %1515 = vmatpush2.msra.mxu0 0.0
    %1516 = vmatprep.subr.mxu0 0.0
    %1517 = vmatpush2.msra.mxu0 0.0
    %1518 = vmatprep.subr.mxu0 0.0
    %1519 = vmatpush2.msra.mxu0 0.0
    %1520 = vmatprep.subr.mxu0 0.0
    %1521 = vmatpush2.msra.mxu0 0.0
    %1522 = vmatprep.subr.mxu0 0.0
    %1523 = vmatpush2.msra.mxu0 0.0
    %1524 = vmatprep.subr.mxu0 0.0
    %1525 = vmatpush2.msra.mxu0 0.0
    %1526 = vmatprep.subr.mxu0 0.0
    %1527 = vmatpush2.msra.mxu0 0.0
    %1528 = vmatprep.subr.mxu0 0.0
    %1529 = vmatpush2.msra.mxu0 0.0
    %1530 = vmatprep.subr.mxu0 0.0
    %1531 = vmatpush2.msra.mxu0 0.0
    %1532 = vmatprep.subr.mxu0 0.0
    %1533 = vmatpush2.msra.mxu0 0.0
    %1534 = vmatprep.subr.mxu0 0.0
    %1535 = vmatpush2.msra.mxu0 0.0
    %1536 = vmatprep.subr.mxu0 0.0
    %1537 = vmatpush2.msra.mxu0 0.0
    %1538 = vmatprep.subr.mxu0 0.0
    %1539 = vmatpush2.msra.mxu0 0.0
    %1540 = vmatprep.subr.mxu0 0.0
    %1541 = vmatpush2.msra.mxu0 0.0
    %1542 = vmatprep.subr.mxu0 0.0
    %1543 = vmatpush2.msra.mxu0 0.0
    %1544 = vmatprep.subr.mxu0 0.0
    %1545 = vmatpush2.msra.mxu0 0.0
    %1546 = vmatprep.mubr.f32.mxu0 0.0
    %1547 = vmatmul.mubr.f32.gmra.mxu0 %v1471
    %v1548 = vpop.f32.mrf.mxu0
    %v1549 = vadd.f32 0.0, %v1548
    %v1550 = vpop.f32.mrf.mxu0
    %1551 = vmatprep.mubr.f32.mxu0 0.0
    %1552 = vmatmul.mubr.f32.gmra.mxu0 %v1474
    %v1553 = vpop.f32.mrf.mxu0
    %v1554 = vadd.f32 0.0, %v1553
    %v1555 = vpop.f32.mrf.mxu0
    %1556 = vmatprep.mubr.f32.mxu0 0.0
    %1557 = vmatmul.mubr.f32.gmra.mxu0 %v1477
    %v1558 = vpop.f32.mrf.mxu0
    %v1559 = vadd.f32 0.0, %v1558
    %v1560 = vpop.f32.mrf.mxu0
    %1561 = vmatprep.mubr.f32.mxu0 0.0
    %1562 = vmatmul.mubr.f32.gmra.mxu0 %v1480
    %v1563 = vpop.f32.mrf.mxu0
    %v1564 = vadd.f32 0.0, %v1563
    %v1565 = vpop.f32.mrf.mxu0
    %1566 = vdwg.mxu0
    %v1568 = vsel %vm1004, %v1301, 0
    %v1571 = vsel %vm1004, %v1302, 0
    %v1574 = vsel %vm1004, %v1303, 0
    %v1577 = vsel %vm1004, %v1304, 0
    %1579 = vmatprep.subr.mxu0 0.0
    %1580 = vmatpush1.msra.mxu0 0.0
    %1581 = vmatprep.subr.mxu0 0.0
    %1582 = vmatpush1.msra.mxu0 0.0
    %1583 = vmatprep.subr.mxu0 0.0
    %1584 = vmatpush1.msra.mxu0 0.0
    %1585 = vmatprep.subr.mxu0 0.0
    %1586 = vmatpush1.msra.mxu0 0.0
    %1587 = vmatprep.subr.mxu0 0.0
    %1588 = vmatpush1.msra.mxu0 0.0
    %1589 = vmatprep.subr.mxu0 0.0
    %1590 = vmatpush1.msra.mxu0 0.0
    %1591 = vmatprep.subr.mxu0 0.0
    %1592 = vmatpush1.msra.mxu0 0.0
    %1593 = vmatprep.subr.mxu0 0.0
    %1594 = vmatpush1.msra.mxu0 0.0
    %1595 = vmatprep.subr.mxu0 0.0
    %1596 = vmatpush1.msra.mxu0 0.0
    %1597 = vmatprep.subr.mxu0 0.0
    %1598 = vmatpush1.msra.mxu0 0.0
    %1599 = vmatprep.subr.mxu0 0.0
    %1600 = vmatpush1.msra.mxu0 0.0
    %1601 = vmatprep.subr.mxu0 0.0
    %1602 = vmatpush1.msra.mxu0 0.0
    %1603 = vmatprep.subr.mxu0 0.0
    %1604 = vmatpush1.msra.mxu0 %v1360
    %1605 = vmatprep.subr.mxu0 0.0
    %1606 = vmatpush1.msra.mxu0 %v1359
    %1607 = vmatprep.subr.mxu0 0.0
    %1608 = vmatpush1.msra.mxu0 %v1358
    %1609 = vmatprep.subr.mxu0 0.0
    %1610 = vmatpush1.msra.mxu0 %v1357
    %1611 = vmatprep.subr.mxu0 0.0
    %1612 = vmatpush2.msra.mxu0 0.0
    %1613 = vmatprep.subr.mxu0 0.0
    %1614 = vmatpush2.msra.mxu0 0.0
    %1615 = vmatprep.subr.mxu0 0.0
    %1616 = vmatpush2.msra.mxu0 0.0
    %1617 = vmatprep.subr.mxu0 0.0
    %1618 = vmatpush2.msra.mxu0 0.0
    %1619 = vmatprep.subr.mxu0 0.0
    %1620 = vmatpush2.msra.mxu0 0.0
    %1621 = vmatprep.subr.mxu0 0.0
    %1622 = vmatpush2.msra.mxu0 0.0
    %1623 = vmatprep.subr.mxu0 0.0
    %1624 = vmatpush2.msra.mxu0 0.0
    %1625 = vmatprep.subr.mxu0 0.0
    %1626 = vmatpush2.msra.mxu0 0.0
    %1627 = vmatprep.subr.mxu0 0.0
    %1628 = vmatpush2.msra.mxu0 0.0
    %1629 = vmatprep.subr.mxu0 0.0
    %1630 = vmatpush2.msra.mxu0 0.0
    %1631 = vmatprep.subr.mxu0 0.0
    %1632 = vmatpush2.msra.mxu0 0.0
    %1633 = vmatprep.subr.mxu0 0.0
    %1634 = vmatpush2.msra.mxu0 0.0
    %1635 = vmatprep.subr.mxu0 0.0
    %1636 = vmatpush2.msra.mxu0 0.0
    %1637 = vmatprep.subr.mxu0 0.0
    %1638 = vmatpush2.msra.mxu0 0.0
    %1639 = vmatprep.subr.mxu0 0.0
    %1640 = vmatpush2.msra.mxu0 0.0
    %1641 = vmatprep.subr.mxu0 0.0
    %1642 = vmatpush2.msra.mxu0 0.0
    %1643 = vmatprep.mubr.f32.mxu0 0.0
    %1644 = vmatmul.mubr.f32.gmra.mxu0 %v1568
    %v1645 = vpop.f32.mrf.mxu0
    %v1646 = vadd.f32 0.0, %v1645
    %v1647 = vpop.f32.mrf.mxu0
    %1648 = vmatprep.mubr.f32.mxu0 0.0
    %1649 = vmatmul.mubr.f32.gmra.mxu0 %v1571
    %v1650 = vpop.f32.mrf.mxu0
    %v1651 = vadd.f32 0.0, %v1650
    %v1652 = vpop.f32.mrf.mxu0
    %1653 = vmatprep.mubr.f32.mxu0 0.0
    %1654 = vmatmul.mubr.f32.gmra.mxu0 %v1574
    %v1655 = vpop.f32.mrf.mxu0
    %v1656 = vadd.f32 0.0, %v1655
    %v1657 = vpop.f32.mrf.mxu0
    %1658 = vmatprep.mubr.f32.mxu0 0.0
    %1659 = vmatmul.mubr.f32.gmra.mxu0 %v1577
    %v1660 = vpop.f32.mrf.mxu0
    %v1661 = vadd.f32 0.0, %v1660
    %v1662 = vpop.f32.mrf.mxu0
    %1663 = vdwg.mxu0
    %v1665 = vsel %vm1004, %v1305, 0
    %v1668 = vsel %vm1004, %v1306, 0
    %v1671 = vsel %vm1004, %v1307, 0
    %v1674 = vsel %vm1004, %v1308, 0
    %1676 = vmatprep.subr.mxu0 0.0
    %1677 = vmatpush1.msra.mxu0 0.0
    %1678 = vmatprep.subr.mxu0 0.0
    %1679 = vmatpush1.msra.mxu0 0.0
    %1680 = vmatprep.subr.mxu0 0.0
    %1681 = vmatpush1.msra.mxu0 0.0
    %1682 = vmatprep.subr.mxu0 0.0
    %1683 = vmatpush1.msra.mxu0 0.0
    %1684 = vmatprep.subr.mxu0 0.0
    %1685 = vmatpush1.msra.mxu0 0.0
    %1686 = vmatprep.subr.mxu0 0.0
    %1687 = vmatpush1.msra.mxu0 0.0
    %1688 = vmatprep.subr.mxu0 0.0
    %1689 = vmatpush1.msra.mxu0 0.0
    %1690 = vmatprep.subr.mxu0 0.0
    %1691 = vmatpush1.msra.mxu0 0.0
    %1692 = vmatprep.subr.mxu0 0.0
    %1693 = vmatpush1.msra.mxu0 0.0
    %1694 = vmatprep.subr.mxu0 0.0
    %1695 = vmatpush1.msra.mxu0 0.0
    %1696 = vmatprep.subr.mxu0 0.0
    %1697 = vmatpush1.msra.mxu0 0.0
    %1698 = vmatprep.subr.mxu0 0.0
    %1699 = vmatpush1.msra.mxu0 0.0
    %1700 = vmatprep.subr.mxu0 0.0
    %1701 = vmatpush1.msra.mxu0 %v1364
    %1702 = vmatprep.subr.mxu0 0.0
    %1703 = vmatpush1.msra.mxu0 %v1363
    %1704 = vmatprep.subr.mxu0 0.0
    %1705 = vmatpush1.msra.mxu0 %v1362
    %1706 = vmatprep.subr.mxu0 0.0
    %1707 = vmatpush1.msra.mxu0 %v1361
    %1708 = vmatprep.subr.mxu0 0.0
    %1709 = vmatpush2.msra.mxu0 0.0
    %1710 = vmatprep.subr.mxu0 0.0
    %1711 = vmatpush2.msra.mxu0 0.0
    %1712 = vmatprep.subr.mxu0 0.0
    %1713 = vmatpush2.msra.mxu0 0.0
    %1714 = vmatprep.subr.mxu0 0.0
    %1715 = vmatpush2.msra.mxu0 0.0
    %1716 = vmatprep.subr.mxu0 0.0
    %1717 = vmatpush2.msra.mxu0 0.0
    %1718 = vmatprep.subr.mxu0 0.0
    %1719 = vmatpush2.msra.mxu0 0.0
    %1720 = vmatprep.subr.mxu0 0.0
    %1721 = vmatpush2.msra.mxu0 0.0
    %1722 = vmatprep.subr.mxu0 0.0
    %1723 = vmatpush2.msra.mxu0 0.0
    %1724 = vmatprep.subr.mxu0 0.0
    %1725 = vmatpush2.msra.mxu0 0.0
    %1726 = vmatprep.subr.mxu0 0.0
    %1727 = vmatpush2.msra.mxu0 0.0
    %1728 = vmatprep.subr.mxu0 0.0
    %1729 = vmatpush2.msra.mxu0 0.0
    %1730 = vmatprep.subr.mxu0 0.0
    %1731 = vmatpush2.msra.mxu0 0.0
    %1732 = vmatprep.subr.mxu0 0.0
    %1733 = vmatpush2.msra.mxu0 0.0
    %1734 = vmatprep.subr.mxu0 0.0
    %1735 = vmatpush2.msra.mxu0 0.0
    %1736 = vmatprep.subr.mxu0 0.0
    %1737 = vmatpush2.msra.mxu0 0.0
    %1738 = vmatprep.subr.mxu0 0.0
    %1739 = vmatpush2.msra.mxu0 0.0
    %1740 = vmatprep.mubr.f32.mxu0 0.0
    %1741 = vmatmul.mubr.f32.gmra.mxu0 %v1665
    %v1742 = vpop.f32.mrf.mxu0
    %v1743 = vadd.f32 0.0, %v1742
    %v1744 = vpop.f32.mrf.mxu0
    %1745 = vmatprep.mubr.f32.mxu0 0.0
    %1746 = vmatmul.mubr.f32.gmra.mxu0 %v1668
    %v1747 = vpop.f32.mrf.mxu0
    %v1748 = vadd.f32 0.0, %v1747
    %v1749 = vpop.f32.mrf.mxu0
    %1750 = vmatprep.mubr.f32.mxu0 0.0
    %1751 = vmatmul.mubr.f32.gmra.mxu0 %v1671
    %v1752 = vpop.f32.mrf.mxu0
    %v1753 = vadd.f32 0.0, %v1752
    %v1754 = vpop.f32.mrf.mxu0
    %1755 = vmatprep.mubr.f32.mxu0 0.0
    %1756 = vmatmul.mubr.f32.gmra.mxu0 %v1674
    %v1757 = vpop.f32.mrf.mxu0
    %v1758 = vadd.f32 0.0, %v1757
    %v1759 = vpop.f32.mrf.mxu0
    %1760 = vdwg.mxu0
    %v1762 = vsel %vm1004, %v1309, 0
    %v1765 = vsel %vm1004, %v1310, 0
    %v1768 = vsel %vm1004, %v1311, 0
    %v1771 = vsel %vm1004, %v1312, 0
    %1773 = vmatprep.subr.mxu0 0.0
    %1774 = vmatpush1.msra.mxu0 0.0
    %1775 = vmatprep.subr.mxu0 0.0
    %1776 = vmatpush1.msra.mxu0 0.0
    %1777 = vmatprep.subr.mxu0 0.0
    %1778 = vmatpush1.msra.mxu0 0.0
    %1779 = vmatprep.subr.mxu0 0.0
    %1780 = vmatpush1.msra.mxu0 0.0
    %1781 = vmatprep.subr.mxu0 0.0
    %1782 = vmatpush1.msra.mxu0 0.0
    %1783 = vmatprep.subr.mxu0 0.0
    %1784 = vmatpush1.msra.mxu0 0.0
    %1785 = vmatprep.subr.mxu0 0.0
    %1786 = vmatpush1.msra.mxu0 0.0
    %1787 = vmatprep.subr.mxu0 0.0
    %1788 = vmatpush1.msra.mxu0 0.0
    %1789 = vmatprep.subr.mxu0 0.0
    %1790 = vmatpush1.msra.mxu0 0.0
    %1791 = vmatprep.subr.mxu0 0.0
    %1792 = vmatpush1.msra.mxu0 0.0
    %1793 = vmatprep.subr.mxu0 0.0
    %1794 = vmatpush1.msra.mxu0 0.0
    %1795 = vmatprep.subr.mxu0 0.0
    %1796 = vmatpush1.msra.mxu0 0.0
    %1797 = vmatprep.subr.mxu0 0.0
    %1798 = vmatpush1.msra.mxu0 %v1368
    %1799 = vmatprep.subr.mxu0 0.0
    %1800 = vmatpush1.msra.mxu0 %v1367
    %1801 = vmatprep.subr.mxu0 0.0
    %1802 = vmatpush1.msra.mxu0 %v1366
    %1803 = vmatprep.subr.mxu0 0.0
    %1804 = vmatpush1.msra.mxu0 %v1365
    %1805 = vmatprep.subr.mxu0 0.0
    %1806 = vmatpush2.msra.mxu0 0.0
    %1807 = vmatprep.subr.mxu0 0.0
    %1808 = vmatpush2.msra.mxu0 0.0
    %1809 = vmatprep.subr.mxu0 0.0
    %1810 = vmatpush2.msra.mxu0 0.0
    %1811 = vmatprep.subr.mxu0 0.0
    %1812 = vmatpush2.msra.mxu0 0.0
    %1813 = vmatprep.subr.mxu0 0.0
    %1814 = vmatpush2.msra.mxu0 0.0
    %1815 = vmatprep.subr.mxu0 0.0
    %1816 = vmatpush2.msra.mxu0 0.0
    %1817 = vmatprep.subr.mxu0 0.0
    %1818 = vmatpush2.msra.mxu0 0.0
    %1819 = vmatprep.subr.mxu0 0.0
    %1820 = vmatpush2.msra.mxu0 0.0
    %1821 = vmatprep.subr.mxu0 0.0
    %1822 = vmatpush2.msra.mxu0 0.0
    %1823 = vmatprep.subr.mxu0 0.0
    %1824 = vmatpush2.msra.mxu0 0.0
    %1825 = vmatprep.subr.mxu0 0.0
    %1826 = vmatpush2.msra.mxu0 0.0
    %1827 = vmatprep.subr.mxu0 0.0
    %1828 = vmatpush2.msra.mxu0 0.0
    %1829 = vmatprep.subr.mxu0 0.0
    %1830 = vmatpush2.msra.mxu0 0.0
    %1831 = vmatprep.subr.mxu0 0.0
    %1832 = vmatpush2.msra.mxu0 0.0
    %1833 = vmatprep.subr.mxu0 0.0
    %1834 = vmatpush2.msra.mxu0 0.0
    %1835 = vmatprep.subr.mxu0 0.0
    %1836 = vmatpush2.msra.mxu0 0.0
    %1837 = vmatprep.mubr.f32.mxu0 0.0
    %1838 = vmatmul.mubr.f32.gmra.mxu0 %v1762
    %v1839 = vpop.f32.mrf.mxu0
    %v1840 = vadd.f32 0.0, %v1839
    %v1841 = vpop.f32.mrf.mxu0
    %1842 = vmatprep.mubr.f32.mxu0 0.0
    %1843 = vmatmul.mubr.f32.gmra.mxu0 %v1765
    %v1844 = vpop.f32.mrf.mxu0
    %v1845 = vadd.f32 0.0, %v1844
    %v1846 = vpop.f32.mrf.mxu0
    %1847 = vmatprep.mubr.f32.mxu0 0.0
    %1848 = vmatmul.mubr.f32.gmra.mxu0 %v1768
    %v1849 = vpop.f32.mrf.mxu0
    %v1850 = vadd.f32 0.0, %v1849
    %v1851 = vpop.f32.mrf.mxu0
    %1852 = vmatprep.mubr.f32.mxu0 0.0
    %1853 = vmatmul.mubr.f32.gmra.mxu0 %v1771
    %v1854 = vpop.f32.mrf.mxu0
    %v1855 = vadd.f32 0.0, %v1854
    %v1856 = vpop.f32.mrf.mxu0
    %1857 = vdwg.mxu0
    %v1859 = vsel %vm1004, %v1313, 0
    %v1862 = vsel %vm1004, %v1314, 0
    %v1865 = vsel %vm1004, %v1315, 0
    %v1868 = vsel %vm1004, %v1316, 0
    %1870 = vmatprep.subr.mxu0 0.0
    %1871 = vmatpush1.msra.mxu0 0.0
    %1872 = vmatprep.subr.mxu0 0.0
    %1873 = vmatpush1.msra.mxu0 0.0
    %1874 = vmatprep.subr.mxu0 0.0
    %1875 = vmatpush1.msra.mxu0 0.0
    %1876 = vmatprep.subr.mxu0 0.0
    %1877 = vmatpush1.msra.mxu0 0.0
    %1878 = vmatprep.subr.mxu0 0.0
    %1879 = vmatpush1.msra.mxu0 0.0
    %1880 = vmatprep.subr.mxu0 0.0
    %1881 = vmatpush1.msra.mxu0 0.0
    %1882 = vmatprep.subr.mxu0 0.0
    %1883 = vmatpush1.msra.mxu0 0.0
    %1884 = vmatprep.subr.mxu0 0.0
    %1885 = vmatpush1.msra.mxu0 0.0
    %1886 = vmatprep.subr.mxu0 0.0
    %1887 = vmatpush1.msra.mxu0 0.0
    %1888 = vmatprep.subr.mxu0 0.0
    %1889 = vmatpush1.msra.mxu0 0.0
    %1890 = vmatprep.subr.mxu0 0.0
    %1891 = vmatpush1.msra.mxu0 0.0
    %1892 = vmatprep.subr.mxu0 0.0
    %1893 = vmatpush1.msra.mxu0 0.0
    %1894 = vmatprep.subr.mxu0 0.0
    %1895 = vmatpush1.msra.mxu0 %v1372
    %1896 = vmatprep.subr.mxu0 0.0
    %1897 = vmatpush1.msra.mxu0 %v1371
    %1898 = vmatprep.subr.mxu0 0.0
    %1899 = vmatpush1.msra.mxu0 %v1370
    %1900 = vmatprep.subr.mxu0 0.0
    %1901 = vmatpush1.msra.mxu0 %v1369
    %1902 = vmatprep.subr.mxu0 0.0
    %1903 = vmatpush2.msra.mxu0 0.0
    %1904 = vmatprep.subr.mxu0 0.0
    %1905 = vmatpush2.msra.mxu0 0.0
    %1906 = vmatprep.subr.mxu0 0.0
    %1907 = vmatpush2.msra.mxu0 0.0
    %1908 = vmatprep.subr.mxu0 0.0
    %1909 = vmatpush2.msra.mxu0 0.0
    %1910 = vmatprep.subr.mxu0 0.0
    %1911 = vmatpush2.msra.mxu0 0.0
    %1912 = vmatprep.subr.mxu0 0.0
    %1913 = vmatpush2.msra.mxu0 0.0
    %1914 = vmatprep.subr.mxu0 0.0
    %1915 = vmatpush2.msra.mxu0 0.0
    %1916 = vmatprep.subr.mxu0 0.0
    %1917 = vmatpush2.msra.mxu0 0.0
    %1918 = vmatprep.subr.mxu0 0.0
    %1919 = vmatpush2.msra.mxu0 0.0
    %1920 = vmatprep.subr.mxu0 0.0
    %1921 = vmatpush2.msra.mxu0 0.0
    %1922 = vmatprep.subr.mxu0 0.0
    %1923 = vmatpush2.msra.mxu0 0.0
    %1924 = vmatprep.subr.mxu0 0.0
    %1925 = vmatpush2.msra.mxu0 0.0
    %1926 = vmatprep.subr.mxu0 0.0
    %1927 = vmatpush2.msra.mxu0 0.0
    %1928 = vmatprep.subr.mxu0 0.0
    %1929 = vmatpush2.msra.mxu0 0.0
    %1930 = vmatprep.subr.mxu0 0.0
    %1931 = vmatpush2.msra.mxu0 0.0
    %1932 = vmatprep.subr.mxu0 0.0
    %1933 = vmatpush2.msra.mxu0 0.0
    %1934 = vmatprep.mubr.f32.mxu0 0.0
    %1935 = vmatmul.mubr.f32.gmra.mxu0 %v1859
    %v1936 = vpop.f32.mrf.mxu0
    %v1937 = vadd.f32 0.0, %v1936
    %v1938 = vpop.f32.mrf.mxu0
    %1939 = vmatprep.mubr.f32.mxu0 0.0
    %1940 = vmatmul.mubr.f32.gmra.mxu0 %v1862
    %v1941 = vpop.f32.mrf.mxu0
    %v1942 = vadd.f32 0.0, %v1941
    %v1943 = vpop.f32.mrf.mxu0
    %1944 = vmatprep.mubr.f32.mxu0 0.0
    %1945 = vmatmul.mubr.f32.gmra.mxu0 %v1865
    %v1946 = vpop.f32.mrf.mxu0
    %v1947 = vadd.f32 0.0, %v1946
    %v1948 = vpop.f32.mrf.mxu0
    %1949 = vmatprep.mubr.f32.mxu0 0.0
    %1950 = vmatmul.mubr.f32.gmra.mxu0 %v1868
    %v1951 = vpop.f32.mrf.mxu0
    %v1952 = vadd.f32 0.0, %v1951
    %v1953 = vpop.f32.mrf.mxu0
    %1954 = vdwg.mxu0
    %v1956 = vsel %vm68, %v1452, 0
    %v1959 = vsel %vm68, %v1457, 0
    %v1962 = vsel %vm68, %v1462, 0
    %v1965 = vsel %vm68, %v1467, 0
    %v1968 = vsel %vm68, %v1549, 0
    %v1971 = vsel %vm68, %v1554, 0
    %v1974 = vsel %vm68, %v1559, 0
    %v1977 = vsel %vm68, %v1564, 0
    %v1980 = vsel %vm68, %v1646, 0
    %v1983 = vsel %vm68, %v1651, 0
    %v1986 = vsel %vm68, %v1656, 0
    %v1989 = vsel %vm68, %v1661, 0
    %v1992 = vsel %vm68, %v1743, 0
    %v1995 = vsel %vm68, %v1748, 0
    %v1998 = vsel %vm68, %v1753, 0
    %v2001 = vsel %vm68, %v1758, 0
    %v2004 = vsel %vm68, %v1840, 0
    %v2007 = vsel %vm68, %v1845, 0
    %v2010 = vsel %vm68, %v1850, 0
    %v2013 = vsel %vm68, %v1855, 0
    %v2016 = vsel %vm68, %v1937, 0
    %v2019 = vsel %vm68, %v1942, 0
    %v2022 = vsel %vm68, %v1947, 0
    %v2025 = vsel %vm68, %v1952, 0
    %2027 = vmatprep.subr.mxu0 0.0
    %2028 = vmatpush1.msra.mxu0 0.0
    %2029 = vmatprep.subr.mxu0 0.0
    %2030 = vmatpush1.msra.mxu0 0.0
    %2031 = vmatprep.subr.mxu0 0.0
    %2032 = vmatpush1.msra.mxu0 0.0
    %2033 = vmatprep.subr.mxu0 0.0
    %2034 = vmatpush1.msra.mxu0 0.0
    %2035 = vmatprep.subr.mxu0 0.0
    %2036 = vmatpush1.msra.mxu0 0.0
    %2037 = vmatprep.subr.mxu0 0.0
    %2038 = vmatpush1.msra.mxu0 0.0
    %2039 = vmatprep.subr.mxu0 0.0
    %2040 = vmatpush1.msra.mxu0 0.0
    %2041 = vmatprep.subr.mxu0 0.0
    %2042 = vmatpush1.msra.mxu0 0.0
    %2043 = vmatprep.subr.mxu0 0.0
    %2044 = vmatpush1.msra.mxu0 0.0
    %2045 = vmatprep.subr.mxu0 0.0
    %2046 = vmatpush1.msra.mxu0 0.0
    %2047 = vmatprep.subr.mxu0 0.0
    %2048 = vmatpush1.msra.mxu0 0.0
    %2049 = vmatprep.subr.mxu0 0.0
    %2050 = vmatpush1.msra.mxu0 0.0
    %2051 = vmatprep.subr.mxu0 0.0
    %2052 = vmatpush1.msra.mxu0 0.0
    %2053 = vmatprep.subr.mxu0 0.0
    %2054 = vmatpush1.msra.mxu0 0.0
    %2055 = vmatprep.subr.mxu0 0.0
    %2056 = vmatpush1.msra.mxu0 0.0
    %2057 = vmatprep.subr.mxu0 0.0
    %2058 = vmatpush1.msra.mxu0 %v63
    %2059 = vmatprep.subr.mxu0 0.0
    %2060 = vmatpush2.msra.mxu0 0.0
    %2061 = vmatprep.subr.mxu0 0.0
    %2062 = vmatpush2.msra.mxu0 0.0
    %2063 = vmatprep.subr.mxu0 0.0
    %2064 = vmatpush2.msra.mxu0 0.0
    %2065 = vmatprep.subr.mxu0 0.0
    %2066 = vmatpush2.msra.mxu0 0.0
    %2067 = vmatprep.subr.mxu0 0.0
    %2068 = vmatpush2.msra.mxu0 0.0
    %2069 = vmatprep.subr.mxu0 0.0
    %2070 = vmatpush2.msra.mxu0 0.0
    %2071 = vmatprep.subr.mxu0 0.0
    %2072 = vmatpush2.msra.mxu0 0.0
    %2073 = vmatprep.subr.mxu0 0.0
    %2074 = vmatpush2.msra.mxu0 0.0
    %2075 = vmatprep.subr.mxu0 0.0
    %2076 = vmatpush2.msra.mxu0 0.0
    %2077 = vmatprep.subr.mxu0 0.0
    %2078 = vmatpush2.msra.mxu0 0.0
    %2079 = vmatprep.subr.mxu0 0.0
    %2080 = vmatpush2.msra.mxu0 0.0
    %2081 = vmatprep.subr.mxu0 0.0
    %2082 = vmatpush2.msra.mxu0 0.0
    %2083 = vmatprep.subr.mxu0 0.0
    %2084 = vmatpush2.msra.mxu0 0.0
    %2085 = vmatprep.subr.mxu0 0.0
    %2086 = vmatpush2.msra.mxu0 0.0
    %2087 = vmatprep.subr.mxu0 0.0
    %2088 = vmatpush2.msra.mxu0 0.0
    %2089 = vmatprep.subr.mxu0 0.0
    %2090 = vmatpush2.msra.mxu0 0.0
    %2091 = vmatprep.mubr.f32.mxu0 0.0
    %2092 = vmatmul.mubr.f32.gmra.mxu0 %v1956
    %v2093 = vpop.f32.mrf.mxu0
    %v2094 = vadd.f32 0.0, %v2093
    %v2095 = vpop.f32.mrf.mxu0
    %2096 = vmatprep.mubr.f32.mxu0 0.0
    %2097 = vmatmul.mubr.f32.gmra.mxu0 %v1959
    %v2098 = vpop.f32.mrf.mxu0
    %v2099 = vadd.f32 0.0, %v2098
    %v2100 = vpop.f32.mrf.mxu0
    %2101 = vmatprep.mubr.f32.mxu0 0.0
    %2102 = vmatmul.mubr.f32.gmra.mxu0 %v1962
    %v2103 = vpop.f32.mrf.mxu0
    %v2104 = vadd.f32 0.0, %v2103
    %v2105 = vpop.f32.mrf.mxu0
    %2106 = vmatprep.mubr.f32.mxu0 0.0
    %2107 = vmatmul.mubr.f32.gmra.mxu0 %v1965
    %v2108 = vpop.f32.mrf.mxu0
    %v2109 = vadd.f32 0.0, %v2108
    %v2110 = vpop.f32.mrf.mxu0
    %2111 = vmatprep.mubr.f32.mxu0 0.0
    %2112 = vmatmul.mubr.f32.gmra.mxu0 %v1968
    %v2113 = vpop.f32.mrf.mxu0
    %v2114 = vadd.f32 0.0, %v2113
    %v2115 = vpop.f32.mrf.mxu0
    %2116 = vmatprep.mubr.f32.mxu0 0.0
    %2117 = vmatmul.mubr.f32.gmra.mxu0 %v1971
    %v2118 = vpop.f32.mrf.mxu0
    %v2119 = vadd.f32 0.0, %v2118
    %v2120 = vpop.f32.mrf.mxu0
    %2121 = vmatprep.mubr.f32.mxu0 0.0
    %2122 = vmatmul.mubr.f32.gmra.mxu0 %v1974
    %v2123 = vpop.f32.mrf.mxu0
    %v2124 = vadd.f32 0.0, %v2123
    %v2125 = vpop.f32.mrf.mxu0
    %2126 = vmatprep.mubr.f32.mxu0 0.0
    %2127 = vmatmul.mubr.f32.gmra.mxu0 %v1977
    %v2128 = vpop.f32.mrf.mxu0
    %v2129 = vadd.f32 0.0, %v2128
    %v2130 = vpop.f32.mrf.mxu0
    %2131 = vmatprep.mubr.f32.mxu0 0.0
    %2132 = vmatmul.mubr.f32.gmra.mxu0 %v1980
    %v2133 = vpop.f32.mrf.mxu0
    %v2134 = vadd.f32 0.0, %v2133
    %v2135 = vpop.f32.mrf.mxu0
    %2136 = vmatprep.mubr.f32.mxu0 0.0
    %2137 = vmatmul.mubr.f32.gmra.mxu0 %v1983
    %v2138 = vpop.f32.mrf.mxu0
    %v2139 = vadd.f32 0.0, %v2138
    %v2140 = vpop.f32.mrf.mxu0
    %2141 = vmatprep.mubr.f32.mxu0 0.0
    %2142 = vmatmul.mubr.f32.gmra.mxu0 %v1986
    %v2143 = vpop.f32.mrf.mxu0
    %v2144 = vadd.f32 0.0, %v2143
    %v2145 = vpop.f32.mrf.mxu0
    %2146 = vmatprep.mubr.f32.mxu0 0.0
    %2147 = vmatmul.mubr.f32.gmra.mxu0 %v1989
    %v2148 = vpop.f32.mrf.mxu0
    %v2149 = vadd.f32 0.0, %v2148
    %v2150 = vpop.f32.mrf.mxu0
    %2151 = vmatprep.mubr.f32.mxu0 0.0
    %2152 = vmatmul.mubr.f32.gmra.mxu0 %v1992
    %v2153 = vpop.f32.mrf.mxu0
    %v2154 = vadd.f32 0.0, %v2153
    %v2155 = vpop.f32.mrf.mxu0
    %2156 = vmatprep.mubr.f32.mxu0 0.0
    %2157 = vmatmul.mubr.f32.gmra.mxu0 %v1995
    %v2158 = vpop.f32.mrf.mxu0
    %v2159 = vadd.f32 0.0, %v2158
    %v2160 = vpop.f32.mrf.mxu0
    %2161 = vmatprep.mubr.f32.mxu0 0.0
    %2162 = vmatmul.mubr.f32.gmra.mxu0 %v1998
    %v2163 = vpop.f32.mrf.mxu0
    %v2164 = vadd.f32 0.0, %v2163
    %v2165 = vpop.f32.mrf.mxu0
    %2166 = vmatprep.mubr.f32.mxu0 0.0
    %2167 = vmatmul.mubr.f32.gmra.mxu0 %v2001
    %v2168 = vpop.f32.mrf.mxu0
    %v2169 = vadd.f32 0.0, %v2168
    %v2170 = vpop.f32.mrf.mxu0
    %2171 = vmatprep.mubr.f32.mxu0 0.0
    %2172 = vmatmul.mubr.f32.gmra.mxu0 %v2004
    %v2173 = vpop.f32.mrf.mxu0
    %v2174 = vadd.f32 0.0, %v2173
    %v2175 = vpop.f32.mrf.mxu0
    %2176 = vmatprep.mubr.f32.mxu0 0.0
    %2177 = vmatmul.mubr.f32.gmra.mxu0 %v2007
    %v2178 = vpop.f32.mrf.mxu0
    %v2179 = vadd.f32 0.0, %v2178
    %v2180 = vpop.f32.mrf.mxu0
    %2181 = vmatprep.mubr.f32.mxu0 0.0
    %2182 = vmatmul.mubr.f32.gmra.mxu0 %v2010
    %v2183 = vpop.f32.mrf.mxu0
    %v2184 = vadd.f32 0.0, %v2183
    %v2185 = vpop.f32.mrf.mxu0
    %2186 = vmatprep.mubr.f32.mxu0 0.0
    %2187 = vmatmul.mubr.f32.gmra.mxu0 %v2013
    %v2188 = vpop.f32.mrf.mxu0
    %v2189 = vadd.f32 0.0, %v2188
    %v2190 = vpop.f32.mrf.mxu0
    %2191 = vmatprep.mubr.f32.mxu0 0.0
    %2192 = vmatmul.mubr.f32.gmra.mxu0 %v2016
    %v2193 = vpop.f32.mrf.mxu0
    %v2194 = vadd.f32 0.0, %v2193
    %v2195 = vpop.f32.mrf.mxu0
    %2196 = vmatprep.mubr.f32.mxu0 0.0
    %2197 = vmatmul.mubr.f32.gmra.mxu0 %v2019
    %v2198 = vpop.f32.mrf.mxu0
    %v2199 = vadd.f32 0.0, %v2198
    %v2200 = vpop.f32.mrf.mxu0
    %2201 = vmatprep.mubr.f32.mxu0 0.0
    %2202 = vmatmul.mubr.f32.gmra.mxu0 %v2022
    %v2203 = vpop.f32.mrf.mxu0
    %v2204 = vadd.f32 0.0, %v2203
    %v2205 = vpop.f32.mrf.mxu0
    %2206 = vmatprep.mubr.f32.mxu0 0.0
    %2207 = vmatmul.mubr.f32.gmra.mxu0 %v2025
    %v2208 = vpop.f32.mrf.mxu0
    %v2209 = vadd.f32 0.0, %v2208
    %v2210 = vpop.f32.mrf.mxu0
    %2211 = vdwg.mxu0
    %2212 = vst.msk [vmem:[#allocation2] sm:$0xff] %vm1004, %v2094
    %2213 = vst.msk [vmem:[#allocation2 + $0x8] sm:$0xff] %vm1004, %v2099
    %2214 = vst.msk [vmem:[#allocation2 + $0x10] sm:$0xff] %vm1004, %v2104
    %2215 = vst.msk [vmem:[#allocation2 + $0x18] sm:$0xff] %vm1004, %v2109
    %2216 = vst.msk [vmem:[#allocation2 + $0x20] sm:$0xff] %vm1004, %v2114
    %2217 = vst.msk [vmem:[#allocation2 + $0x28] sm:$0xff] %vm1004, %v2119
    %2218 = vst.msk [vmem:[#allocation2 + $0x30] sm:$0xff] %vm1004, %v2124
    %2219 = vst.msk [vmem:[#allocation2 + $0x38] sm:$0xff] %vm1004, %v2129
    %2220 = vst.msk [vmem:[#allocation2 + $0x40] sm:$0xff] %vm1004, %v2134
    %2221 = vst.msk [vmem:[#allocation2 + $0x48] sm:$0xff] %vm1004, %v2139
    %2222 = vst.msk [vmem:[#allocation2 + $0x50] sm:$0xff] %vm1004, %v2144
    %2223 = vst.msk [vmem:[#allocation2 + $0x58] sm:$0xff] %vm1004, %v2149
    %2224 = vst.msk [vmem:[#allocation2 + $0x60] sm:$0xff] %vm1004, %v2154
    %2225 = vst.msk [vmem:[#allocation2 + $0x68] sm:$0xff] %vm1004, %v2159
    %2226 = vst.msk [vmem:[#allocation2 + $0x70] sm:$0xff] %vm1004, %v2164
    %2227 = vst.msk [vmem:[#allocation2 + $0x78] sm:$0xff] %vm1004, %v2169
    %2228 = vst.msk [vmem:[#allocation2 + $0x80] sm:$0xff] %vm1004, %v2174
    %2229 = vst.msk [vmem:[#allocation2 + $0x88] sm:$0xff] %vm1004, %v2179
    %2230 = vst.msk [vmem:[#allocation2 + $0x90] sm:$0xff] %vm1004, %v2184
    %2231 = vst.msk [vmem:[#allocation2 + $0x98] sm:$0xff] %vm1004, %v2189
    %2232 = vst.msk [vmem:[#allocation2 + $0xa0] sm:$0xff] %vm1004, %v2194
    %2233 = vst.msk [vmem:[#allocation2 + $0xa8] sm:$0xff] %vm1004, %v2199
    %2234 = vst.msk [vmem:[#allocation2 + $0xb0] sm:$0xff] %vm1004, %v2204
    %2235 = vst.msk [vmem:[#allocation2 + $0xb8] sm:$0xff] %vm1004, %v2209
    // Predicated region
    $region22: #{tpu_custom_call.1} parent=1 // pred_check
      _
    $region23: #{tpu_custom_call.1} parent=1 // pred_check_branch
      %2237 = sbr.rel (0) target = $region25
    $region24: #{tpu_custom_call.1} parent=1 // pred_region
      %s2239 = ssub.s32 3072, 3072
      %2240 = vsyncadd [#allocation3], %s2239
      %s2241 = sshll.u32 [#allocation2], 4
      %s2242 = int_to_ptr.vmem [resolvable:$true] %s2241
      %2247 = dma.vmem_to_hbm [thread:$0]  %s2242, 3072, %s5, [#allocation3], 128, 128, 8
    $region25: #{tpu_custom_call.1} parent=1 // pred_fallthru
      _
    // Predicated region
    $region26: #{tpu_custom_call.1} parent=1 // pred_check
      _
    $region27: #{tpu_custom_call.1} parent=1 // pred_check_branch
      %2249 = sbr.rel (0) target = $region29
    $region28: #{tpu_custom_call.1} parent=1 // pred_region
      %2250 = dma.done [#allocation3], 3072
    $region29: #{tpu_custom_call.1} parent=1 // pred_fallthru
      _
    %2251 = vsyncpa [#allocation3], 1

</llo_original>
